<compile_context>
chip_gen: v7x
topology: tpu7x:2x2x1
jax: 0.10.0
libtpu: 0.0.40
codegen_flags: <defaults>
</compile_context>

<pallas_src>
import functools

import jax
import jax.numpy as jnp
from jax.experimental import pallas as pl
from jax.experimental.pallas import tpu as pltpu


def policy_kernel(x_ref, w1_ref, b1_ref, w2_ref, b2_ref, w3_ref, b3c_ref, b3r_ref,
                  o_ref, *, agents_per_block, action_dim):
    G, A = agents_per_block, action_dim

    # 3-layer MLP on a [G*A, obs_dim] slab (M = G*A rows on the MXU).
    # Layers 1-2: bf16 operands, f32 accumulation. Dropout(eval) = identity.
    h1 = jnp.dot(x_ref[...], w1_ref[...], preferred_element_type=jnp.float32) + b1_ref[...]
    h1 = jnp.maximum(h1, 0.0).astype(jnp.bfloat16)
    h2 = jnp.dot(h1, w2_ref[...], preferred_element_type=jnp.float32) + b2_ref[...]
    h2 = jnp.maximum(h2, 0.0)                                   # f32 for the (tiny) final layer
    z = jnp.dot(h2, w3_ref[...], preferred_element_type=jnp.float32)   # [G*A, A], pre-bias

    # Repack lane-dense BEFORE bias + tanh (the permutation commutes with tanh):
    #   left [r, g*A + j] = vec_g[j, r]   (pre-act is exactly z.T — one global 2-D transpose)
    #   right[r, g*A + j] = vec_g[r, j]   (pre-act: per-agent row blocks packed along lanes)
    left = jnp.tanh(z.T + b3c_ref[...])                                   # [A, G*A]
    pz = jnp.concatenate([z[g * A:(g + 1) * A, :] for g in range(G)], axis=1)
    right = jnp.tanh(pz + b3r_ref[...])                                   # [A, G*A]

    # torch.mul(vec.T, vec) per agent, written as ONE unmasked lane-dense store.
    o_ref[...] = left * right


def sample_policy_forward(states, params, *, agents_per_block=64):
    """Batched forward. states: [N, B, obs_dim] with B == action_dim.
    Returns [N, action_dim, B]; each slice equals torch.mul(vec.T, vec) for that agent."""
    N, B, obs_dim = states.shape
    H = params["w1"].shape[1]
    A = params["w3"].shape[1]
    assert B == A, "torch.mul(vec.T, vec) broadcasting requires batch == action_dim"
    assert agents_per_block % 16 == 0, "agents_per_block must be a multiple of 16"

    G = agents_per_block
    # Keep >= 2 grid steps when there is enough work so v7x's two TensorCores both get fed.
    if N > 16 and (N + G - 1) // G < 2:
        G = max(16, ((N + 1) // 2 + 15) // 16 * 16)
    n_blocks = (N + G - 1) // G
    Np = n_blocks * G
    M = G * B                                      # rows per grid step (multiple of 128)

    x = states
    if Np != N:                                    # pad agent axis to a whole number of blocks
        x = jnp.concatenate([x, jnp.zeros((Np - N, B, obs_dim), x.dtype)], axis=0)
    x_all = x.reshape(Np * B, obs_dim).astype(jnp.bfloat16)   # bf16 streaming input

    w1 = params["w1"].astype(jnp.bfloat16)
    w2 = params["w2"].astype(jnp.bfloat16)
    b1 = params["b1"]
    b2 = params["b2"]
    w3 = params["w3"]                              # final layer stays f32
    b3c = params["b3"].T                           # [A, 1]   bias for the z.T layout
    b3r = jnp.tile(params["b3"], (1, G))           # [1, M]   bias tiled per-agent for pz

    kern = functools.partial(policy_kernel, agents_per_block=G, action_dim=A)
    out_slab = pl.pallas_call(
        kern,
        out_shape=jax.ShapeDtypeStruct((A, Np * B), jnp.float32),
        grid_spec=pltpu.PrefetchScalarGridSpec(
            num_scalar_prefetch=0,
            grid=(n_blocks,),
            in_specs=[
                pl.BlockSpec((M, obs_dim), lambda i: (i, 0)),   # states: streamed per step
                pl.BlockSpec((obs_dim, H), lambda i: (0, 0)),   # w1: VMEM-resident
                pl.BlockSpec((1, H), lambda i: (0, 0)),         # b1
                pl.BlockSpec((H, H), lambda i: (0, 0)),         # w2
                pl.BlockSpec((1, H), lambda i: (0, 0)),         # b2
                pl.BlockSpec((H, A), lambda i: (0, 0)),         # w3
                pl.BlockSpec((A, 1), lambda i: (0, 0)),         # b3 as a column (for z.T)
                pl.BlockSpec((1, M), lambda i: (0, 0)),         # b3 tiled per-agent (for pz)
            ],
            out_specs=pl.BlockSpec((A, M), lambda i: (0, i)),   # lane-dense [A, M] block
        ),
        compiler_params=pltpu.CompilerParams(dimension_semantics=("parallel",)),
    )(x_all, w1, b1, w2, b2, w3, b3c, b3r)

    # Unpack the lane-dense slab: [A, Np*B] -> [Np, A, B] -> drop padding (layout plumbing only).
    out = out_slab.reshape(A, Np, B).transpose(1, 0, 2)
    return out[:N]


def init_params(key, obs_dim, hidden_dim, action_dim):
    """Deterministic init mirroring nn.Linear's default U(-1/sqrt(fan_in), 1/sqrt(fan_in))."""
    ks = jax.random.split(key, 6)

    def linear(kw, kb, fan_in, fan_out):
        bound = float(1.0 / (fan_in ** 0.5))
        w = jax.random.uniform(kw, (fan_in, fan_out), jnp.float32, -bound, bound)
        b = jax.random.uniform(kb, (1, fan_out), jnp.float32, -bound, bound)
        return w, b

    w1, b1 = linear(ks[0], ks[1], obs_dim, hidden_dim)
    w2, b2 = linear(ks[2], ks[3], hidden_dim, hidden_dim)
    w3, b3 = linear(ks[4], ks[5], hidden_dim, action_dim)
    return dict(w1=w1, b1=b1, w2=w2, b2=b2, w3=w3, b3=b3)


def reference_forward_single(state, p):
    h1 = jnp.maximum(state @ p["w1"] + p["b1"], 0.0)
    h2 = jnp.maximum(h1 @ p["w2"] + p["b2"], 0.0)
    vec = jnp.tanh(h2 @ p["w3"] + p["b3"])
    return vec.T * vec


if __name__ == "__main__":
    obs_dim, hidden_dim, action_dim = 32, 128, 8
    batch = action_dim          # B == action_dim required by torch.mul(vec.T, vec)
    num_agents = 256            # many policy evaluations batched under the grid (4 grid steps)

    key = jax.random.PRNGKey(0)
    k_param, k_state = jax.random.split(key)
    params = init_params(k_param, obs_dim, hidden_dim, action_dim)
    states = jax.random.normal(k_state, (num_agents, batch, obs_dim), jnp.float32)

    out = sample_policy_forward(states, params, agents_per_block=64)
    out = jax.block_until_ready(out)
    assert out.shape == (num_agents, action_dim, batch)

    ref = jax.vmap(lambda s: reference_forward_single(s, params))(states)
    # Tolerance loosened vs pure-f32 because layers 1-2 run the MXU in bf16 (f32 accumulation).
    assert jnp.allclose(out, ref, atol=3e-2, rtol=3e-2), "mismatch vs pure-JAX reference"

    print("KERNEL_OK")
</pallas_src>

<mosaic_0001>
module attributes {stable_mosaic.version = 11 : i64} {
  func.func @policy_kernel(%arg0: i32, %arg1: memref<512x32xbf16, #tpu.memory_space<vmem>>, %arg2: memref<32x128xbf16, #tpu.memory_space<vmem>>, %arg3: memref<1x128xf32, #tpu.memory_space<vmem>>, %arg4: memref<128x128xbf16, #tpu.memory_space<vmem>>, %arg5: memref<1x128xf32, #tpu.memory_space<vmem>>, %arg6: memref<128x8xf32, #tpu.memory_space<vmem>>, %arg7: memref<8x1xf32, #tpu.memory_space<vmem>>, %arg8: memref<1x512xf32, #tpu.memory_space<vmem>>, %arg9: memref<8x512xf32, #tpu.memory_space<vmem>>) attributes {dimension_semantics = [#tpu.dimension_semantics<parallel>], iteration_bounds = array<i64: 4>, scalar_prefetch = 0 : i64, scratch_operands = 0 : i64, tpu.core_type = #tpu.core_type<tc>, window_params = [{transform_indices = @transform_0, window_bounds = array<i64: 512, 32>}, {pipeline_mode = #tpu.pipeline_mode<synchronous>, transform_indices = @transform_1, window_bounds = array<i64: 32, 128>}, {pipeline_mode = #tpu.pipeline_mode<synchronous>, transform_indices = @transform_2, window_bounds = array<i64: 1, 128>}, {pipeline_mode = #tpu.pipeline_mode<synchronous>, transform_indices = @transform_3, window_bounds = array<i64: 128, 128>}, {pipeline_mode = #tpu.pipeline_mode<synchronous>, transform_indices = @transform_4, window_bounds = array<i64: 1, 128>}, {pipeline_mode = #tpu.pipeline_mode<synchronous>, transform_indices = @transform_5, window_bounds = array<i64: 128, 8>}, {pipeline_mode = #tpu.pipeline_mode<synchronous>, transform_indices = @transform_6, window_bounds = array<i64: 8, 1>}, {pipeline_mode = #tpu.pipeline_mode<synchronous>, transform_indices = @transform_7, window_bounds = array<i64: 1, 512>}, {transform_indices = @transform_8, window_bounds = array<i64: 8, 512>}]} {
    %c0 = arith.constant 0 : index
    %c0_0 = arith.constant 0 : index
    %0 = vector.load %arg1[%c0, %c0_0] : memref<512x32xbf16, #tpu.memory_space<vmem>>, vector<512x32xbf16>
    %c0_1 = arith.constant 0 : index
    %c0_2 = arith.constant 0 : index
    %1 = vector.load %arg2[%c0_1, %c0_2] : memref<32x128xbf16, #tpu.memory_space<vmem>>, vector<32x128xbf16>
    %cst = arith.constant dense<0.000000e+00> : vector<512x128xf32>
    %2 = tpu.matmul %0, %1, %cst {dimension_numbers = #tpu.dot_dimension_numbers<[1], [0], [0], [1], [0, 0, 1, 1], [], []>} : vector<512x32xbf16>, vector<32x128xbf16>, vector<512x128xf32> -> vector<512x128xf32>
    %c0_3 = arith.constant 0 : index
    %c0_4 = arith.constant 0 : index
    %3 = vector.load %arg3[%c0_3, %c0_4] : memref<1x128xf32, #tpu.memory_space<vmem>>, vector<1x128xf32>
    %4 = vector.broadcast %3 : vector<1x128xf32> to vector<512x128xf32>
    %5 = arith.addf %2, %4 : vector<512x128xf32>
    %cst_5 = arith.constant 0.000000e+00 : f32
    %6 = vector.broadcast %cst_5 : f32 to vector<512x128xf32>
    %7 = arith.maximumf %5, %6 : vector<512x128xf32>
    %8 = arith.truncf %7 : vector<512x128xf32> to vector<512x128xbf16>
    %c0_6 = arith.constant 0 : index
    %c0_7 = arith.constant 0 : index
    %9 = vector.load %arg4[%c0_6, %c0_7] : memref<128x128xbf16, #tpu.memory_space<vmem>>, vector<128x128xbf16>
    %cst_8 = arith.constant dense<0.000000e+00> : vector<512x128xf32>
    %10 = tpu.matmul %8, %9, %cst_8 {dimension_numbers = #tpu.dot_dimension_numbers<[1], [0], [0], [1], [0, 0, 1, 1], [], []>} : vector<512x128xbf16>, vector<128x128xbf16>, vector<512x128xf32> -> vector<512x128xf32>
    %c0_9 = arith.constant 0 : index
    %c0_10 = arith.constant 0 : index
    %11 = vector.load %arg5[%c0_9, %c0_10] : memref<1x128xf32, #tpu.memory_space<vmem>>, vector<1x128xf32>
    %12 = vector.broadcast %11 : vector<1x128xf32> to vector<512x128xf32>
    %13 = arith.addf %10, %12 : vector<512x128xf32>
    %cst_11 = arith.constant 0.000000e+00 : f32
    %14 = vector.broadcast %cst_11 : f32 to vector<512x128xf32>
    %15 = arith.maximumf %13, %14 : vector<512x128xf32>
    %c0_12 = arith.constant 0 : index
    %c0_13 = arith.constant 0 : index
    %16 = vector.load %arg6[%c0_12, %c0_13] : memref<128x8xf32, #tpu.memory_space<vmem>>, vector<128x8xf32>
    %cst_14 = arith.constant dense<0.000000e+00> : vector<512x8xf32>
    %17 = tpu.matmul %15, %16, %cst_14 {dimension_numbers = #tpu.dot_dimension_numbers<[1], [0], [0], [1], [0, 0, 1, 1], [], []>} : vector<512x128xf32>, vector<128x8xf32>, vector<512x8xf32> -> vector<512x8xf32>
    %18 = tpu.transpose %17, [1, 0] : vector<512x8xf32> -> vector<8x512xf32>
    %c0_15 = arith.constant 0 : index
    %c0_16 = arith.constant 0 : index
    %19 = vector.load %arg7[%c0_15, %c0_16] : memref<8x1xf32, #tpu.memory_space<vmem>>, vector<8x1xf32>
    %20 = vector.broadcast %19 : vector<8x1xf32> to vector<8x512xf32>
    %21 = arith.addf %18, %20 : vector<8x512xf32>
    %22 = math.tanh %21 : vector<8x512xf32>
    %23 = vector.extract_strided_slice %17 {offsets = [0, 0], sizes = [8, 8], strides = [1, 1]} : vector<512x8xf32> to vector<8x8xf32>
    %24 = vector.extract_strided_slice %17 {offsets = [8, 0], sizes = [8, 8], strides = [1, 1]} : vector<512x8xf32> to vector<8x8xf32>
    %25 = vector.extract_strided_slice %17 {offsets = [16, 0], sizes = [8, 8], strides = [1, 1]} : vector<512x8xf32> to vector<8x8xf32>
    %26 = vector.extract_strided_slice %17 {offsets = [24, 0], sizes = [8, 8], strides = [1, 1]} : vector<512x8xf32> to vector<8x8xf32>
    %27 = vector.extract_strided_slice %17 {offsets = [32, 0], sizes = [8, 8], strides = [1, 1]} : vector<512x8xf32> to vector<8x8xf32>
    %28 = vector.extract_strided_slice %17 {offsets = [40, 0], sizes = [8, 8], strides = [1, 1]} : vector<512x8xf32> to vector<8x8xf32>
    %29 = vector.extract_strided_slice %17 {offsets = [48, 0], sizes = [8, 8], strides = [1, 1]} : vector<512x8xf32> to vector<8x8xf32>
    %30 = vector.extract_strided_slice %17 {offsets = [56, 0], sizes = [8, 8], strides = [1, 1]} : vector<512x8xf32> to vector<8x8xf32>
    %31 = vector.extract_strided_slice %17 {offsets = [64, 0], sizes = [8, 8], strides = [1, 1]} : vector<512x8xf32> to vector<8x8xf32>
    %32 = vector.extract_strided_slice %17 {offsets = [72, 0], sizes = [8, 8], strides = [1, 1]} : vector<512x8xf32> to vector<8x8xf32>
    %33 = vector.extract_strided_slice %17 {offsets = [80, 0], sizes = [8, 8], strides = [1, 1]} : vector<512x8xf32> to vector<8x8xf32>
    %34 = vector.extract_strided_slice %17 {offsets = [88, 0], sizes = [8, 8], strides = [1, 1]} : vector<512x8xf32> to vector<8x8xf32>
    %35 = vector.extract_strided_slice %17 {offsets = [96, 0], sizes = [8, 8], strides = [1, 1]} : vector<512x8xf32> to vector<8x8xf32>
    %36 = vector.extract_strided_slice %17 {offsets = [104, 0], sizes = [8, 8], strides = [1, 1]} : vector<512x8xf32> to vector<8x8xf32>
    %37 = vector.extract_strided_slice %17 {offsets = [112, 0], sizes = [8, 8], strides = [1, 1]} : vector<512x8xf32> to vector<8x8xf32>
    %38 = vector.extract_strided_slice %17 {offsets = [120, 0], sizes = [8, 8], strides = [1, 1]} : vector<512x8xf32> to vector<8x8xf32>
    %39 = vector.extract_strided_slice %17 {offsets = [128, 0], sizes = [8, 8], strides = [1, 1]} : vector<512x8xf32> to vector<8x8xf32>
    %40 = vector.extract_strided_slice %17 {offsets = [136, 0], sizes = [8, 8], strides = [1, 1]} : vector<512x8xf32> to vector<8x8xf32>
    %41 = vector.extract_strided_slice %17 {offsets = [144, 0], sizes = [8, 8], strides = [1, 1]} : vector<512x8xf32> to vector<8x8xf32>
    %42 = vector.extract_strided_slice %17 {offsets = [152, 0], sizes = [8, 8], strides = [1, 1]} : vector<512x8xf32> to vector<8x8xf32>
    %43 = vector.extract_strided_slice %17 {offsets = [160, 0], sizes = [8, 8], strides = [1, 1]} : vector<512x8xf32> to vector<8x8xf32>
    %44 = vector.extract_strided_slice %17 {offsets = [168, 0], sizes = [8, 8], strides = [1, 1]} : vector<512x8xf32> to vector<8x8xf32>
    %45 = vector.extract_strided_slice %17 {offsets = [176, 0], sizes = [8, 8], strides = [1, 1]} : vector<512x8xf32> to vector<8x8xf32>
    %46 = vector.extract_strided_slice %17 {offsets = [184, 0], sizes = [8, 8], strides = [1, 1]} : vector<512x8xf32> to vector<8x8xf32>
    %47 = vector.extract_strided_slice %17 {offsets = [192, 0], sizes = [8, 8], strides = [1, 1]} : vector<512x8xf32> to vector<8x8xf32>
    %48 = vector.extract_strided_slice %17 {offsets = [200, 0], sizes = [8, 8], strides = [1, 1]} : vector<512x8xf32> to vector<8x8xf32>
    %49 = vector.extract_strided_slice %17 {offsets = [208, 0], sizes = [8, 8], strides = [1, 1]} : vector<512x8xf32> to vector<8x8xf32>
    %50 = vector.extract_strided_slice %17 {offsets = [216, 0], sizes = [8, 8], strides = [1, 1]} : vector<512x8xf32> to vector<8x8xf32>
    %51 = vector.extract_strided_slice %17 {offsets = [224, 0], sizes = [8, 8], strides = [1, 1]} : vector<512x8xf32> to vector<8x8xf32>
    %52 = vector.extract_strided_slice %17 {offsets = [232, 0], sizes = [8, 8], strides = [1, 1]} : vector<512x8xf32> to vector<8x8xf32>
    %53 = vector.extract_strided_slice %17 {offsets = [240, 0], sizes = [8, 8], strides = [1, 1]} : vector<512x8xf32> to vector<8x8xf32>
    %54 = vector.extract_strided_slice %17 {offsets = [248, 0], sizes = [8, 8], strides = [1, 1]} : vector<512x8xf32> to vector<8x8xf32>
    %55 = vector.extract_strided_slice %17 {offsets = [256, 0], sizes = [8, 8], strides = [1, 1]} : vector<512x8xf32> to vector<8x8xf32>
    %56 = vector.extract_strided_slice %17 {offsets = [264, 0], sizes = [8, 8], strides = [1, 1]} : vector<512x8xf32> to vector<8x8xf32>
    %57 = vector.extract_strided_slice %17 {offsets = [272, 0], sizes = [8, 8], strides = [1, 1]} : vector<512x8xf32> to vector<8x8xf32>
    %58 = vector.extract_strided_slice %17 {offsets = [280, 0], sizes = [8, 8], strides = [1, 1]} : vector<512x8xf32> to vector<8x8xf32>
    %59 = vector.extract_strided_slice %17 {offsets = [288, 0], sizes = [8, 8], strides = [1, 1]} : vector<512x8xf32> to vector<8x8xf32>
    %60 = vector.extract_strided_slice %17 {offsets = [296, 0], sizes = [8, 8], strides = [1, 1]} : vector<512x8xf32> to vector<8x8xf32>
    %61 = vector.extract_strided_slice %17 {offsets = [304, 0], sizes = [8, 8], strides = [1, 1]} : vector<512x8xf32> to vector<8x8xf32>
    %62 = vector.extract_strided_slice %17 {offsets = [312, 0], sizes = [8, 8], strides = [1, 1]} : vector<512x8xf32> to vector<8x8xf32>
    %63 = vector.extract_strided_slice %17 {offsets = [320, 0], sizes = [8, 8], strides = [1, 1]} : vector<512x8xf32> to vector<8x8xf32>
    %64 = vector.extract_strided_slice %17 {offsets = [328, 0], sizes = [8, 8], strides = [1, 1]} : vector<512x8xf32> to vector<8x8xf32>
    %65 = vector.extract_strided_slice %17 {offsets = [336, 0], sizes = [8, 8], strides = [1, 1]} : vector<512x8xf32> to vector<8x8xf32>
    %66 = vector.extract_strided_slice %17 {offsets = [344, 0], sizes = [8, 8], strides = [1, 1]} : vector<512x8xf32> to vector<8x8xf32>
    %67 = vector.extract_strided_slice %17 {offsets = [352, 0], sizes = [8, 8], strides = [1, 1]} : vector<512x8xf32> to vector<8x8xf32>
    %68 = vector.extract_strided_slice %17 {offsets = [360, 0], sizes = [8, 8], strides = [1, 1]} : vector<512x8xf32> to vector<8x8xf32>
    %69 = vector.extract_strided_slice %17 {offsets = [368, 0], sizes = [8, 8], strides = [1, 1]} : vector<512x8xf32> to vector<8x8xf32>
    %70 = vector.extract_strided_slice %17 {offsets = [376, 0], sizes = [8, 8], strides = [1, 1]} : vector<512x8xf32> to vector<8x8xf32>
    %71 = vector.extract_strided_slice %17 {offsets = [384, 0], sizes = [8, 8], strides = [1, 1]} : vector<512x8xf32> to vector<8x8xf32>
    %72 = vector.extract_strided_slice %17 {offsets = [392, 0], sizes = [8, 8], strides = [1, 1]} : vector<512x8xf32> to vector<8x8xf32>
    %73 = vector.extract_strided_slice %17 {offsets = [400, 0], sizes = [8, 8], strides = [1, 1]} : vector<512x8xf32> to vector<8x8xf32>
    %74 = vector.extract_strided_slice %17 {offsets = [408, 0], sizes = [8, 8], strides = [1, 1]} : vector<512x8xf32> to vector<8x8xf32>
    %75 = vector.extract_strided_slice %17 {offsets = [416, 0], sizes = [8, 8], strides = [1, 1]} : vector<512x8xf32> to vector<8x8xf32>
    %76 = vector.extract_strided_slice %17 {offsets = [424, 0], sizes = [8, 8], strides = [1, 1]} : vector<512x8xf32> to vector<8x8xf32>
    %77 = vector.extract_strided_slice %17 {offsets = [432, 0], sizes = [8, 8], strides = [1, 1]} : vector<512x8xf32> to vector<8x8xf32>
    %78 = vector.extract_strided_slice %17 {offsets = [440, 0], sizes = [8, 8], strides = [1, 1]} : vector<512x8xf32> to vector<8x8xf32>
    %79 = vector.extract_strided_slice %17 {offsets = [448, 0], sizes = [8, 8], strides = [1, 1]} : vector<512x8xf32> to vector<8x8xf32>
    %80 = vector.extract_strided_slice %17 {offsets = [456, 0], sizes = [8, 8], strides = [1, 1]} : vector<512x8xf32> to vector<8x8xf32>
    %81 = vector.extract_strided_slice %17 {offsets = [464, 0], sizes = [8, 8], strides = [1, 1]} : vector<512x8xf32> to vector<8x8xf32>
    %82 = vector.extract_strided_slice %17 {offsets = [472, 0], sizes = [8, 8], strides = [1, 1]} : vector<512x8xf32> to vector<8x8xf32>
    %83 = vector.extract_strided_slice %17 {offsets = [480, 0], sizes = [8, 8], strides = [1, 1]} : vector<512x8xf32> to vector<8x8xf32>
    %84 = vector.extract_strided_slice %17 {offsets = [488, 0], sizes = [8, 8], strides = [1, 1]} : vector<512x8xf32> to vector<8x8xf32>
    %85 = vector.extract_strided_slice %17 {offsets = [496, 0], sizes = [8, 8], strides = [1, 1]} : vector<512x8xf32> to vector<8x8xf32>
    %86 = vector.extract_strided_slice %17 {offsets = [504, 0], sizes = [8, 8], strides = [1, 1]} : vector<512x8xf32> to vector<8x8xf32>
    %87 = tpu.concatenate %23, %24, %25, %26, %27, %28, %29, %30, %31, %32, %33, %34, %35, %36, %37, %38 in 1 : vector<8x8xf32>, vector<8x8xf32>, vector<8x8xf32>, vector<8x8xf32>, vector<8x8xf32>, vector<8x8xf32>, vector<8x8xf32>, vector<8x8xf32>, vector<8x8xf32>, vector<8x8xf32>, vector<8x8xf32>, vector<8x8xf32>, vector<8x8xf32>, vector<8x8xf32>, vector<8x8xf32>, vector<8x8xf32> -> vector<8x128xf32>
    %88 = tpu.concatenate %39, %40, %41, %42, %43, %44, %45, %46, %47, %48, %49, %50, %51, %52, %53, %54 in 1 : vector<8x8xf32>, vector<8x8xf32>, vector<8x8xf32>, vector<8x8xf32>, vector<8x8xf32>, vector<8x8xf32>, vector<8x8xf32>, vector<8x8xf32>, vector<8x8xf32>, vector<8x8xf32>, vector<8x8xf32>, vector<8x8xf32>, vector<8x8xf32>, vector<8x8xf32>, vector<8x8xf32>, vector<8x8xf32> -> vector<8x128xf32>
    %89 = tpu.concatenate %55, %56, %57, %58, %59, %60, %61, %62, %63, %64, %65, %66, %67, %68, %69, %70 in 1 : vector<8x8xf32>, vector<8x8xf32>, vector<8x8xf32>, vector<8x8xf32>, vector<8x8xf32>, vector<8x8xf32>, vector<8x8xf32>, vector<8x8xf32>, vector<8x8xf32>, vector<8x8xf32>, vector<8x8xf32>, vector<8x8xf32>, vector<8x8xf32>, vector<8x8xf32>, vector<8x8xf32>, vector<8x8xf32> -> vector<8x128xf32>
    %90 = tpu.concatenate %71, %72, %73, %74, %75, %76, %77, %78, %79, %80, %81, %82, %83, %84, %85, %86 in 1 : vector<8x8xf32>, vector<8x8xf32>, vector<8x8xf32>, vector<8x8xf32>, vector<8x8xf32>, vector<8x8xf32>, vector<8x8xf32>, vector<8x8xf32>, vector<8x8xf32>, vector<8x8xf32>, vector<8x8xf32>, vector<8x8xf32>, vector<8x8xf32>, vector<8x8xf32>, vector<8x8xf32>, vector<8x8xf32> -> vector<8x128xf32>
    %91 = tpu.concatenate %87, %88, %89, %90 in 1 : vector<8x128xf32>, vector<8x128xf32>, vector<8x128xf32>, vector<8x128xf32> -> vector<8x512xf32>
    %c0_17 = arith.constant 0 : index
    %c0_18 = arith.constant 0 : index
    %92 = vector.load %arg8[%c0_17, %c0_18] : memref<1x512xf32, #tpu.memory_space<vmem>>, vector<1x512xf32>
    %93 = vector.broadcast %92 : vector<1x512xf32> to vector<8x512xf32>
    %94 = arith.addf %91, %93 : vector<8x512xf32>
    %95 = math.tanh %94 : vector<8x512xf32>
    %96 = arith.mulf %22, %95 : vector<8x512xf32>
    %c0_19 = arith.constant 0 : index
    %c0_20 = arith.constant 0 : index
    %97 = vector.load %arg9[%c0_19, %c0_20] : memref<8x512xf32, #tpu.memory_space<vmem>>, vector<8x512xf32>
    tpu.vector_store %arg9[%c0_19, %c0_20], %96 {strides = array<i32>} : memref<8x512xf32, #tpu.memory_space<vmem>>, vector<8x512xf32>,
    return
  }
  func.func @transform_0(%arg0: i32) -> (i32, i32) {
    %c0_i32 = arith.constant 0 : i32
    %c0_i32_0 = arith.constant 0 : i32
    return %arg0, %c0_i32 : i32, i32
  }
  func.func @transform_1(%arg0: i32) -> (i32, i32) {
    %c0_i32 = arith.constant 0 : i32
    %c0_i32_0 = arith.constant 0 : i32
    %c0_i32_1 = arith.constant 0 : i32
    return %c0_i32, %c0_i32_0 : i32, i32
  }
  func.func @transform_2(%arg0: i32) -> (i32, i32) {
    %c0_i32 = arith.constant 0 : i32
    %c0_i32_0 = arith.constant 0 : i32
    %c0_i32_1 = arith.constant 0 : i32
    return %c0_i32, %c0_i32_0 : i32, i32
  }
  func.func @transform_3(%arg0: i32) -> (i32, i32) {
    %c0_i32 = arith.constant 0 : i32
    %c0_i32_0 = arith.constant 0 : i32
    %c0_i32_1 = arith.constant 0 : i32
    return %c0_i32, %c0_i32_0 : i32, i32
  }
  func.func @transform_4(%arg0: i32) -> (i32, i32) {
    %c0_i32 = arith.constant 0 : i32
    %c0_i32_0 = arith.constant 0 : i32
    %c0_i32_1 = arith.constant 0 : i32
    return %c0_i32, %c0_i32_0 : i32, i32
  }
  func.func @transform_5(%arg0: i32) -> (i32, i32) {
    %c0_i32 = arith.constant 0 : i32
    %c0_i32_0 = arith.constant 0 : i32
    %c0_i32_1 = arith.constant 0 : i32
    return %c0_i32, %c0_i32_0 : i32, i32
  }
  func.func @transform_6(%arg0: i32) -> (i32, i32) {
    %c0_i32 = arith.constant 0 : i32
    %c0_i32_0 = arith.constant 0 : i32
    %c0_i32_1 = arith.constant 0 : i32
    return %c0_i32, %c0_i32_0 : i32, i32
  }
  func.func @transform_7(%arg0: i32) -> (i32, i32) {
    %c0_i32 = arith.constant 0 : i32
    %c0_i32_0 = arith.constant 0 : i32
    %c0_i32_1 = arith.constant 0 : i32
    return %c0_i32, %c0_i32_0 : i32, i32
  }
  func.func @transform_8(%arg0: i32) -> (i32, i32) {
    %c0_i32 = arith.constant 0 : i32
    %c0_i32_0 = arith.constant 0 : i32
    return %c0_i32, %arg0 : i32, i32
  }
}

</mosaic_0001>

<llo_original>
// kernel: tpu_custom_call.1
$region0: #{tpu_custom_call.1}
  #allocation0 [shape = 'u32[]', space=smem, size = 0x4, offset = 0x4, fixed_abs, tag = 'smem constant byte address 0x4 - core index']
  #allocation1 [shape = 'u32[144,128]{1,0:T(1,128)}', space=vmem, size = 0x12000, scoped, tag = 'internal scratch']
  %s0 = inlined_call_operand.vmem [shape: bf16[2048,32], index: 0, kind: input, shape index: {}]
  %s1 = inlined_call_operand.vmem [shape: bf16[32,128], index: 1, kind: input, shape index: {}]
  %s2 = inlined_call_operand.vmem [shape: f32[1,128], index: 2, kind: input, shape index: {}]
  %s3 = inlined_call_operand.vmem [shape: bf16[128,128], index: 3, kind: input, shape index: {}]
  %s4 = inlined_call_operand.vmem [shape: f32[1,128], index: 4, kind: input, shape index: {}]
  %s5 = inlined_call_operand.vmem [shape: f32[128,8], index: 5, kind: input, shape index: {}]
  %s6 = inlined_call_operand.vmem [shape: f32[8,1], index: 6, kind: input, shape index: {}]
  %s7 = inlined_call_operand.vmem [shape: f32[1,512], index: 7, kind: input, shape index: {}]
  %s8 = inlined_call_operand.hbm [shape: f32[8,2048], index: 8, kind: output, shape index: {}]
  %s9 = sld [smem:[#allocation0]]
  $region65: #{tpu_custom_call.1} parent=0
    _
  %s11 = ssub.s32 1, %s9
  %s12 = scalar_select 0, %s11, %s9
  $region1: #{tpu_custom_call.1} parent=0
    #allocation2 [shape = 'u8[32768]{0}', space=vmem, size = 0x8000, scoped, tag = 'output window, operand 0']
    #allocation3 [shape = 's32[2]{0}', space=sflag, size = 0x8, scoped, tag = 'scoped memory for tpu_custom_call.1']
    %13 = vsyncpa [#allocation3], 0
    %s14 = scalar_lea.sflag [#allocation3], 1
    %15 = vsyncpa %s14, 0
    loop: start=0, step=1, limit=6
    $region2: #{tpu_custom_call.1} parent=1 // loop_pre_header
      _
    $region3: #{tpu_custom_call.1} parent=1 // loop_header
      %s17 = sphi 0, %s21
      %p18 = scmp.ge.s32.totalorder %s17, 6
      %s27 = sphi 0, %s29
      %s30 = sphi 0, %s27
      %s31 = sphi 0, %s30
      %s47 = sphi 0, %s31
      %s51 = sphi 0, %s51
      %s53 = sphi 0, %s51
      %s54 = sphi 0, %s53
      %s68 = sphi 0, %s54
      %s72 = sphi 0, %s72
      %s74 = sphi 0, %s72
      %s75 = sphi 0, %s74
      %s89 = sphi 0, %s75
      %s93 = sphi 0, %s93
      %s95 = sphi 0, %s93
      %s96 = sphi 0, %s95
      %s110 = sphi 0, %s96
      %s114 = sphi 0, %s114
      %s116 = sphi 0, %s114
      %s117 = sphi 0, %s116
      %s131 = sphi 0, %s117
      %s135 = sphi 0, %s135
      %s137 = sphi 0, %s135
      %s138 = sphi 0, %s137
      %s152 = sphi 0, %s138
      %s156 = sphi 0, %s156
      %s158 = sphi 0, %s156
      %s159 = sphi 0, %s158
      %s173 = sphi 0, %s159
      %s177 = sphi 0, %s177
      %s179 = sphi 0, %s177
      %s180 = sphi 0, %s179
      %s194 = sphi 0, %s180
      %s200 = sphi 0, %s202
      %s203 = sphi 0, %s200
      %s204 = sphi 0, %s203
      %s220 = sphi 0, %s204
    $region4: #{tpu_custom_call.1} parent=1 // loop_header_branch
      %20 = sbr.rel (%p18) target = $region8
    $region5: #{tpu_custom_call.1} parent=1 // loop_body
      %s22 = ssub.s32 %s17, 1
      %s23 = ssub.s32 %s17, 2
      %s24 = sadd.s32 %s17, 1
      %s25 = ssub.s32 %s17, %s24
      %p26 = scmp.eq.s32.totalorder %s25, 0
      %s28 = sadd.s32 %s27, 1
      %s29 = scalar_select %p26, %s27, %s28
      %p32 = pneg %p26
      %p33 = scmp.eq.s32.totalorder %s17, 3
      %p34 = por %p32, %p33
      %p35 = scmp.ne.s32.totalorder %s27, %s30
      %p36 = scmp.eq.s32.totalorder %s17, 0
      %p37 = por %p35, %p36
      %p38 = scmp.ne.s32.totalorder %s27, %s30
      %p39 = scmp.eq.s32.totalorder %s22, 3
      %p40 = por %p38, %p39
      %p41 = scmp.ne.s32.totalorder %s30, %s31
      %p42 = scmp.eq.s32.totalorder %s22, 0
      %p43 = por %p41, %p42
      %p44 = scmp.ne.s32.totalorder %s30, %s31
      %p45 = scmp.eq.s32.totalorder %s23, 3
      %p46 = por %p44, %p45
      %p48 = scmp.ne.s32.totalorder %s31, %s47
      %p49 = scmp.eq.s32.totalorder %s23, 0
      %p50 = por %p48, %p49
      %s52 = sadd.s32 %s51, 1
      %p55 = scmp.eq.s32.totalorder %s17, 3
      %p56 = scmp.ne.s32.totalorder %s51, %s53
      %p57 = scmp.eq.s32.totalorder %s17, 0
      %p58 = por %p56, %p57
      %p59 = scmp.ne.s32.totalorder %s51, %s53
      %p60 = scmp.eq.s32.totalorder %s22, 3
      %p61 = por %p59, %p60
      %p62 = scmp.ne.s32.totalorder %s53, %s54
      %p63 = scmp.eq.s32.totalorder %s22, 0
      %p64 = por %p62, %p63
      %p65 = scmp.ne.s32.totalorder %s53, %s54
      %p66 = scmp.eq.s32.totalorder %s23, 3
      %p67 = por %p65, %p66
      %p69 = scmp.ne.s32.totalorder %s54, %s68
      %p70 = scmp.eq.s32.totalorder %s23, 0
      %p71 = por %p69, %p70
      %s73 = sadd.s32 %s72, 1
      %p76 = scmp.eq.s32.totalorder %s17, 3
      %p77 = scmp.ne.s32.totalorder %s72, %s74
      %p78 = scmp.eq.s32.totalorder %s17, 0
      %p79 = por %p77, %p78
      %p80 = scmp.ne.s32.totalorder %s72, %s74
      %p81 = scmp.eq.s32.totalorder %s22, 3
      %p82 = por %p80, %p81
      %p83 = scmp.ne.s32.totalorder %s74, %s75
      %p84 = scmp.eq.s32.totalorder %s22, 0
      %p85 = por %p83, %p84
      %p86 = scmp.ne.s32.totalorder %s74, %s75
      %p87 = scmp.eq.s32.totalorder %s23, 3
      %p88 = por %p86, %p87
      %p90 = scmp.ne.s32.totalorder %s75, %s89
      %p91 = scmp.eq.s32.totalorder %s23, 0
      %p92 = por %p90, %p91
      %s94 = sadd.s32 %s93, 1
      %p97 = scmp.eq.s32.totalorder %s17, 3
      %p98 = scmp.ne.s32.totalorder %s93, %s95
      %p99 = scmp.eq.s32.totalorder %s17, 0
      %p100 = por %p98, %p99
      %p101 = scmp.ne.s32.totalorder %s93, %s95
      %p102 = scmp.eq.s32.totalorder %s22, 3
      %p103 = por %p101, %p102
      %p104 = scmp.ne.s32.totalorder %s95, %s96
      %p105 = scmp.eq.s32.totalorder %s22, 0
      %p106 = por %p104, %p105
      %p107 = scmp.ne.s32.totalorder %s95, %s96
      %p108 = scmp.eq.s32.totalorder %s23, 3
      %p109 = por %p107, %p108
      %p111 = scmp.ne.s32.totalorder %s96, %s110
      %p112 = scmp.eq.s32.totalorder %s23, 0
      %p113 = por %p111, %p112
      %s115 = sadd.s32 %s114, 1
      %p118 = scmp.eq.s32.totalorder %s17, 3
      %p119 = scmp.ne.s32.totalorder %s114, %s116
      %p120 = scmp.eq.s32.totalorder %s17, 0
      %p121 = por %p119, %p120
      %p122 = scmp.ne.s32.totalorder %s114, %s116
      %p123 = scmp.eq.s32.totalorder %s22, 3
      %p124 = por %p122, %p123
      %p125 = scmp.ne.s32.totalorder %s116, %s117
      %p126 = scmp.eq.s32.totalorder %s22, 0
      %p127 = por %p125, %p126
      %p128 = scmp.ne.s32.totalorder %s116, %s117
      %p129 = scmp.eq.s32.totalorder %s23, 3
      %p130 = por %p128, %p129
      %p132 = scmp.ne.s32.totalorder %s117, %s131
      %p133 = scmp.eq.s32.totalorder %s23, 0
      %p134 = por %p132, %p133
      %s136 = sadd.s32 %s135, 1
      %p139 = scmp.eq.s32.totalorder %s17, 3
      %p140 = scmp.ne.s32.totalorder %s135, %s137
      %p141 = scmp.eq.s32.totalorder %s17, 0
      %p142 = por %p140, %p141
      %p143 = scmp.ne.s32.totalorder %s135, %s137
      %p144 = scmp.eq.s32.totalorder %s22, 3
      %p145 = por %p143, %p144
      %p146 = scmp.ne.s32.totalorder %s137, %s138
      %p147 = scmp.eq.s32.totalorder %s22, 0
      %p148 = por %p146, %p147
      %p149 = scmp.ne.s32.totalorder %s137, %s138
      %p150 = scmp.eq.s32.totalorder %s23, 3
      %p151 = por %p149, %p150
      %p153 = scmp.ne.s32.totalorder %s138, %s152
      %p154 = scmp.eq.s32.totalorder %s23, 0
      %p155 = por %p153, %p154
      %s157 = sadd.s32 %s156, 1
      %p160 = scmp.eq.s32.totalorder %s17, 3
      %p161 = scmp.ne.s32.totalorder %s156, %s158
      %p162 = scmp.eq.s32.totalorder %s17, 0
      %p163 = por %p161, %p162
      %p164 = scmp.ne.s32.totalorder %s156, %s158
      %p165 = scmp.eq.s32.totalorder %s22, 3
      %p166 = por %p164, %p165
      %p167 = scmp.ne.s32.totalorder %s158, %s159
      %p168 = scmp.eq.s32.totalorder %s22, 0
      %p169 = por %p167, %p168
      %p170 = scmp.ne.s32.totalorder %s158, %s159
      %p171 = scmp.eq.s32.totalorder %s23, 3
      %p172 = por %p170, %p171
      %p174 = scmp.ne.s32.totalorder %s159, %s173
      %p175 = scmp.eq.s32.totalorder %s23, 0
      %p176 = por %p174, %p175
      %s178 = sadd.s32 %s177, 1
      %p181 = scmp.eq.s32.totalorder %s17, 3
      %p182 = scmp.ne.s32.totalorder %s177, %s179
      %p183 = scmp.eq.s32.totalorder %s17, 0
      %p184 = por %p182, %p183
      %p185 = scmp.ne.s32.totalorder %s177, %s179
      %p186 = scmp.eq.s32.totalorder %s22, 3
      %p187 = por %p185, %p186
      %p188 = scmp.ne.s32.totalorder %s179, %s180
      %p189 = scmp.eq.s32.totalorder %s22, 0
      %p190 = por %p188, %p189
      %p191 = scmp.ne.s32.totalorder %s179, %s180
      %p192 = scmp.eq.s32.totalorder %s23, 3
      %p193 = por %p191, %p192
      %p195 = scmp.ne.s32.totalorder %s180, %s194
      %p196 = scmp.eq.s32.totalorder %s23, 0
      %p197 = por %p195, %p196
      %s198 = ssub.s32 %s17, %s24
      %p199 = scmp.eq.s32.totalorder %s198, 0
      %s201 = sadd.s32 %s200, 1
      %s202 = scalar_select %p199, %s200, %s201
      %p205 = pneg %p199
      %p206 = scmp.eq.s32.totalorder %s17, 3
      %p207 = por %p205, %p206
      %p208 = scmp.ne.s32.totalorder %s200, %s203
      %p209 = scmp.eq.s32.totalorder %s17, 0
      %p210 = por %p208, %p209
      %p211 = scmp.ne.s32.totalorder %s200, %s203
      %p212 = scmp.eq.s32.totalorder %s22, 3
      %p213 = por %p211, %p212
      %p214 = scmp.ne.s32.totalorder %s203, %s204
      %p215 = scmp.eq.s32.totalorder %s22, 0
      %p216 = por %p214, %p215
      %p217 = scmp.ne.s32.totalorder %s203, %s204
      %p218 = scmp.eq.s32.totalorder %s23, 3
      %p219 = por %p217, %p218
      %p221 = scmp.ne.s32.totalorder %s204, %s220
      %p222 = scmp.eq.s32.totalorder %s23, 0
      %p223 = por %p221, %p222
      %p224 = scmp.le.s32.totalorder 1, %s17
      %p225 = scmp.lt.s32.totalorder %s17, 5
      %p226 = pnand %p224, %p225
      %p227 = pneg %p226
      // Predicated region
      $region9: #{tpu_custom_call.1} parent=5 // pred_check
        _
      $region10: #{tpu_custom_call.1} parent=5 // pred_check_branch
        %229 = sbr.rel (%p226) target = $region12
      $region11: #{tpu_custom_call.1} parent=5 // pred_region
        %s230 = ssub.s32 %s17, 1
        // Predicated region
        $region13: #{tpu_custom_call.1} parent=11 // pred_check
          %p231 = pneg %p64
        $region14: #{tpu_custom_call.1} parent=11 // pred_check_branch
          %233 = sbr.rel (%p231) target = $region16
        $region15: #{tpu_custom_call.1} parent=11 // pred_region
          _
        $region16: #{tpu_custom_call.1} parent=11 // pred_fallthru
          _
        // Predicated region
        $region17: #{tpu_custom_call.1} parent=11 // pred_check
          %p234 = pneg %p85
        $region18: #{tpu_custom_call.1} parent=11 // pred_check_branch
          %236 = sbr.rel (%p234) target = $region20
        $region19: #{tpu_custom_call.1} parent=11 // pred_region
          _
        $region20: #{tpu_custom_call.1} parent=11 // pred_fallthru
          _
        // Predicated region
        $region21: #{tpu_custom_call.1} parent=11 // pred_check
          %p237 = pneg %p106
        $region22: #{tpu_custom_call.1} parent=11 // pred_check_branch
          %239 = sbr.rel (%p237) target = $region24
        $region23: #{tpu_custom_call.1} parent=11 // pred_region
          _
        $region24: #{tpu_custom_call.1} parent=11 // pred_fallthru
          _
        // Predicated region
        $region25: #{tpu_custom_call.1} parent=11 // pred_check
          %p240 = pneg %p127
        $region26: #{tpu_custom_call.1} parent=11 // pred_check_branch
          %242 = sbr.rel (%p240) target = $region28
        $region27: #{tpu_custom_call.1} parent=11 // pred_region
          _
        $region28: #{tpu_custom_call.1} parent=11 // pred_fallthru
          _
        // Predicated region
        $region29: #{tpu_custom_call.1} parent=11 // pred_check
          %p243 = pneg %p148
        $region30: #{tpu_custom_call.1} parent=11 // pred_check_branch
          %245 = sbr.rel (%p243) target = $region32
        $region31: #{tpu_custom_call.1} parent=11 // pred_region
          _
        $region32: #{tpu_custom_call.1} parent=11 // pred_fallthru
          _
        // Predicated region
        $region33: #{tpu_custom_call.1} parent=11 // pred_check
          %p246 = pneg %p169
        $region34: #{tpu_custom_call.1} parent=11 // pred_check_branch
          %248 = sbr.rel (%p246) target = $region36
        $region35: #{tpu_custom_call.1} parent=11 // pred_region
          _
        $region36: #{tpu_custom_call.1} parent=11 // pred_fallthru
          _
        // Predicated region
        $region37: #{tpu_custom_call.1} parent=11 // pred_check
          %p249 = pneg %p190
        $region38: #{tpu_custom_call.1} parent=11 // pred_check_branch
          %251 = sbr.rel (%p249) target = $region40
        $region39: #{tpu_custom_call.1} parent=11 // pred_region
          _
        $region40: #{tpu_custom_call.1} parent=11 // pred_fallthru
          _
      $region12: #{tpu_custom_call.1} parent=5 // pred_fallthru
        _
      %p252 = scmp.lt.s32.totalorder %s17, 4
      // Predicated region
      $region41: #{tpu_custom_call.1} parent=5 // pred_check
        %p253 = pneg %p252
      $region42: #{tpu_custom_call.1} parent=5 // pred_check_branch
        %255 = sbr.rel (%p253) target = $region44
      $region43: #{tpu_custom_call.1} parent=5 // pred_region
        // Predicated region
        $region45: #{tpu_custom_call.1} parent=43 // pred_check
          %p256 = pneg %p37
        $region46: #{tpu_custom_call.1} parent=43 // pred_check_branch
          %258 = sbr.rel (%p256) target = $region48
        $region47: #{tpu_custom_call.1} parent=43 // pred_region
          %s259 = smul.u32 64, %s17
          %p260 = scmp.lt.s32.totalorder %s259, 255
          %s261 = scalar_select %p260, %s259, 255
          %s262 = smul.addr %s261, 4
          %s263 = scalar_lea.vmem %s0, %s262
          %s264 = smul.u32 64, %s17
        $region48: #{tpu_custom_call.1} parent=43 // pred_fallthru
          _
      $region44: #{tpu_custom_call.1} parent=5 // pred_fallthru
        _
      %p265 = scmp.le.s32.totalorder 1, %s17
      %p266 = scmp.lt.s32.totalorder %s17, 5
      %p267 = pnand %p265, %p266
      %p268 = pneg %p267
      // Predicated region
      $region49: #{tpu_custom_call.1} parent=5 // pred_check
        _
      $region50: #{tpu_custom_call.1} parent=5 // pred_check_branch
        %270 = sbr.rel (%p267) target = $region52
      $region51: #{tpu_custom_call.1} parent=5 // pred_region
        %s271 = ssub.s32 %s17, 1
        %s272 = smul.u32 64, %s22
        %p273 = scmp.lt.s32.totalorder %s272, 255
        %s274 = scalar_select %p273, %s272, 255
        %s275 = smul.addr %s274, 4
        %s276 = scalar_lea.vmem %s0, %s275
        %p277 = pneg %p43
        %p278 = pneg %p40
        %p279 = pneg %p64
        %p280 = pneg %p61
        %p281 = pneg %p85
        %p282 = pneg %p82
        %p283 = pneg %p106
        %p284 = pneg %p103
        %p285 = pneg %p127
        %p286 = pneg %p124
        %p287 = pneg %p148
        %p288 = pneg %p145
        %p289 = pneg %p169
        %p290 = pneg %p166
        %p291 = pneg %p190
        %p292 = pneg %p187
        %p293 = pneg %p216
        %p294 = pneg %p213
        %s295 = sand.u32 %s203, 1
        %s296 = scalar_lea.sflag [#allocation3], %s295
        %s297 = sand.u32 %s203, 1
        %s298 = smul.addr %s297, 32
        %s299 = scalar_lea.vmem [#allocation2], %s298
        %s300 = smul.u32 64, %s22
        %p301 = scmp.lt.s32.totalorder %s300, 255
        %s302 = scalar_select %p301, %s300, 255
        %s303 = smul.addr %s302, 4
        %s304 = scalar_lea.vmem %s0, %s303
        %s305 = smul.u32 64, %s22
        %s306 = smul.u32 4, %s22
        %v308 = vld [vmem:[%s304] sm:$0xf]
        %v309 = vld [vmem:[%s304 + $0x4] sm:$0xf]
        %v310 = vld [vmem:[%s304 + $0x8] sm:$0xf]
        %v311 = vld [vmem:[%s304 + $0xc] sm:$0xf]
        %v312 = vld [vmem:[%s304 + $0x10] sm:$0xf]
        %v313 = vld [vmem:[%s304 + $0x14] sm:$0xf]
        %v314 = vld [vmem:[%s304 + $0x18] sm:$0xf]
        %v315 = vld [vmem:[%s304 + $0x1c] sm:$0xf]
        %v316 = vld [vmem:[%s304 + $0x20] sm:$0xf]
        %v317 = vld [vmem:[%s304 + $0x24] sm:$0xf]
        %v318 = vld [vmem:[%s304 + $0x28] sm:$0xf]
        %v319 = vld [vmem:[%s304 + $0x2c] sm:$0xf]
        %v320 = vld [vmem:[%s304 + $0x30] sm:$0xf]
        %v321 = vld [vmem:[%s304 + $0x34] sm:$0xf]
        %v322 = vld [vmem:[%s304 + $0x38] sm:$0xf]
        %v323 = vld [vmem:[%s304 + $0x3c] sm:$0xf]
        %v324 = vld [vmem:[%s304 + $0x40] sm:$0xf]
        %v325 = vld [vmem:[%s304 + $0x44] sm:$0xf]
        %v326 = vld [vmem:[%s304 + $0x48] sm:$0xf]
        %v327 = vld [vmem:[%s304 + $0x4c] sm:$0xf]
        %v328 = vld [vmem:[%s304 + $0x50] sm:$0xf]
        %v329 = vld [vmem:[%s304 + $0x54] sm:$0xf]
        %v330 = vld [vmem:[%s304 + $0x58] sm:$0xf]
        %v331 = vld [vmem:[%s304 + $0x5c] sm:$0xf]
        %v332 = vld [vmem:[%s304 + $0x60] sm:$0xf]
        %v333 = vld [vmem:[%s304 + $0x64] sm:$0xf]
        %v334 = vld [vmem:[%s304 + $0x68] sm:$0xf]
        %v335 = vld [vmem:[%s304 + $0x6c] sm:$0xf]
        %v336 = vld [vmem:[%s304 + $0x70] sm:$0xf]
        %v337 = vld [vmem:[%s304 + $0x74] sm:$0xf]
        %v338 = vld [vmem:[%s304 + $0x78] sm:$0xf]
        %v339 = vld [vmem:[%s304 + $0x7c] sm:$0xf]
        %v340 = vld [vmem:[%s304 + $0x80] sm:$0xf]
        %v341 = vld [vmem:[%s304 + $0x84] sm:$0xf]
        %v342 = vld [vmem:[%s304 + $0x88] sm:$0xf]
        %v343 = vld [vmem:[%s304 + $0x8c] sm:$0xf]
        %v344 = vld [vmem:[%s304 + $0x90] sm:$0xf]
        %v345 = vld [vmem:[%s304 + $0x94] sm:$0xf]
        %v346 = vld [vmem:[%s304 + $0x98] sm:$0xf]
        %v347 = vld [vmem:[%s304 + $0x9c] sm:$0xf]
        %v348 = vld [vmem:[%s304 + $0xa0] sm:$0xf]
        %v349 = vld [vmem:[%s304 + $0xa4] sm:$0xf]
        %v350 = vld [vmem:[%s304 + $0xa8] sm:$0xf]
        %v351 = vld [vmem:[%s304 + $0xac] sm:$0xf]
        %v352 = vld [vmem:[%s304 + $0xb0] sm:$0xf]
        %v353 = vld [vmem:[%s304 + $0xb4] sm:$0xf]
        %v354 = vld [vmem:[%s304 + $0xb8] sm:$0xf]
        %v355 = vld [vmem:[%s304 + $0xbc] sm:$0xf]
        %v356 = vld [vmem:[%s304 + $0xc0] sm:$0xf]
        %v357 = vld [vmem:[%s304 + $0xc4] sm:$0xf]
        %v358 = vld [vmem:[%s304 + $0xc8] sm:$0xf]
        %v359 = vld [vmem:[%s304 + $0xcc] sm:$0xf]
        %v360 = vld [vmem:[%s304 + $0xd0] sm:$0xf]
        %v361 = vld [vmem:[%s304 + $0xd4] sm:$0xf]
        %v362 = vld [vmem:[%s304 + $0xd8] sm:$0xf]
        %v363 = vld [vmem:[%s304 + $0xdc] sm:$0xf]
        %v364 = vld [vmem:[%s304 + $0xe0] sm:$0xf]
        %v365 = vld [vmem:[%s304 + $0xe4] sm:$0xf]
        %v366 = vld [vmem:[%s304 + $0xe8] sm:$0xf]
        %v367 = vld [vmem:[%s304 + $0xec] sm:$0xf]
        %v368 = vld [vmem:[%s304 + $0xf0] sm:$0xf]
        %v369 = vld [vmem:[%s304 + $0xf4] sm:$0xf]
        %v370 = vld [vmem:[%s304 + $0xf8] sm:$0xf]
        %v371 = vld [vmem:[%s304 + $0xfc] sm:$0xf]
        %v372 = vld [vmem:[%s1] sm:$0xf]
        %v373 = vld [vmem:[%s1 + $0x4] sm:$0xf]
        %v374 = vld [vmem:[%s1 + $0x8] sm:$0xf]
        %v375 = vld [vmem:[%s1 + $0xc] sm:$0xf]
        %v376 = vld [vmem:[%s2] sm:$0x1]
        %v378 = vlaneseq
        %v379 = vshrl.u32 %v378, 7
        %v380 = vsub.s32 0, %v379
        %v381 = vrot.slane %v376, %v380
        %v447 = vunpack.c.l.b16 %v308
        %v448 = vunpack.c.l.b16 %v309
        %v449 = vunpack.c.l.b16 %v310
        %v450 = vunpack.c.l.b16 %v311
        %v451 = vunpack.c.l.b16 %v312
        %v452 = vunpack.c.l.b16 %v313
        %v453 = vunpack.c.l.b16 %v314
        %v454 = vunpack.c.l.b16 %v315
        %v455 = vunpack.c.l.b16 %v316
        %v456 = vunpack.c.l.b16 %v317
        %v457 = vunpack.c.l.b16 %v318
        %v458 = vunpack.c.l.b16 %v319
        %v459 = vunpack.c.l.b16 %v320
        %v460 = vunpack.c.l.b16 %v321
        %v461 = vunpack.c.l.b16 %v322
        %v462 = vunpack.c.l.b16 %v323
        %v463 = vunpack.c.l.b16 %v324
        %v464 = vunpack.c.l.b16 %v325
        %v465 = vunpack.c.l.b16 %v326
        %v466 = vunpack.c.l.b16 %v327
        %v467 = vunpack.c.l.b16 %v328
        %v468 = vunpack.c.l.b16 %v329
        %v469 = vunpack.c.l.b16 %v330
        %v470 = vunpack.c.l.b16 %v331
        %v471 = vunpack.c.l.b16 %v332
        %v472 = vunpack.c.l.b16 %v333
        %v473 = vunpack.c.l.b16 %v334
        %v474 = vunpack.c.l.b16 %v335
        %v475 = vunpack.c.l.b16 %v336
        %v476 = vunpack.c.l.b16 %v337
        %v477 = vunpack.c.l.b16 %v338
        %v478 = vunpack.c.l.b16 %v339
        %v479 = vunpack.c.l.b16 %v340
        %v480 = vunpack.c.l.b16 %v341
        %v481 = vunpack.c.l.b16 %v342
        %v482 = vunpack.c.l.b16 %v343
        %v483 = vunpack.c.l.b16 %v344
        %v484 = vunpack.c.l.b16 %v345
        %v485 = vunpack.c.l.b16 %v346
        %v486 = vunpack.c.l.b16 %v347
        %v487 = vunpack.c.l.b16 %v348
        %v488 = vunpack.c.l.b16 %v349
        %v489 = vunpack.c.l.b16 %v350
        %v490 = vunpack.c.l.b16 %v351
        %v491 = vunpack.c.l.b16 %v352
        %v492 = vunpack.c.l.b16 %v353
        %v493 = vunpack.c.l.b16 %v354
        %v494 = vunpack.c.l.b16 %v355
        %v495 = vunpack.c.l.b16 %v356
        %v496 = vunpack.c.l.b16 %v357
        %v497 = vunpack.c.l.b16 %v358
        %v498 = vunpack.c.l.b16 %v359
        %v499 = vunpack.c.l.b16 %v360
        %v500 = vunpack.c.l.b16 %v361
        %v501 = vunpack.c.l.b16 %v362
        %v502 = vunpack.c.l.b16 %v363
        %v503 = vunpack.c.l.b16 %v364
        %v504 = vunpack.c.l.b16 %v365
        %v505 = vunpack.c.l.b16 %v366
        %v506 = vunpack.c.l.b16 %v367
        %v507 = vunpack.c.l.b16 %v368
        %v508 = vunpack.c.l.b16 %v369
        %v509 = vunpack.c.l.b16 %v370
        %v510 = vunpack.c.l.b16 %v371
        %v511 = vpack.c.b16 %v448, %v447
        %v512 = vpack.c.b16 %v450, %v449
        %v513 = vpack.c.b16 %v452, %v451
        %v514 = vpack.c.b16 %v454, %v453
        %v515 = vpack.c.b16 %v456, %v455
        %v516 = vpack.c.b16 %v458, %v457
        %v517 = vpack.c.b16 %v460, %v459
        %v518 = vpack.c.b16 %v462, %v461
        %v519 = vpack.c.b16 %v464, %v463
        %v520 = vpack.c.b16 %v466, %v465
        %v521 = vpack.c.b16 %v468, %v467
        %v522 = vpack.c.b16 %v470, %v469
        %v523 = vpack.c.b16 %v472, %v471
        %v524 = vpack.c.b16 %v474, %v473
        %v525 = vpack.c.b16 %v476, %v475
        %v526 = vpack.c.b16 %v478, %v477
        %v527 = vpack.c.b16 %v480, %v479
        %v528 = vpack.c.b16 %v482, %v481
        %v529 = vpack.c.b16 %v484, %v483
        %v530 = vpack.c.b16 %v486, %v485
        %v531 = vpack.c.b16 %v488, %v487
        %v532 = vpack.c.b16 %v490, %v489
        %v533 = vpack.c.b16 %v492, %v491
        %v534 = vpack.c.b16 %v494, %v493
        %v535 = vpack.c.b16 %v496, %v495
        %v536 = vpack.c.b16 %v498, %v497
        %v537 = vpack.c.b16 %v500, %v499
        %v538 = vpack.c.b16 %v502, %v501
        %v539 = vpack.c.b16 %v504, %v503
        %v540 = vpack.c.b16 %v506, %v505
        %v541 = vpack.c.b16 %v508, %v507
        %v542 = vpack.c.b16 %v510, %v509
        %v547 = vunpack.c.l.b16 %v372
        %v548 = vunpack.c.l.b16 %v373
        %v549 = vunpack.c.l.b16 %v374
        %v550 = vunpack.c.l.b16 %v375
        %v551 = vpack.c.b16 %v548, %v547
        %v552 = vpack.c.b16 %v550, %v549
        %vm555 = vcmask 261120
        %v557 = vsel %vm555, %v511, 0
        %v560 = vsel %vm555, %v512, 0
        %v563 = vsel %vm555, %v513, 0
        %v566 = vsel %vm555, %v514, 0
        %v569 = vsel %vm555, %v515, 0
        %v572 = vsel %vm555, %v516, 0
        %v575 = vsel %vm555, %v517, 0
        %v578 = vsel %vm555, %v518, 0
        %v581 = vsel %vm555, %v519, 0
        %v584 = vsel %vm555, %v520, 0
        %v587 = vsel %vm555, %v521, 0
        %v590 = vsel %vm555, %v522, 0
        %v593 = vsel %vm555, %v523, 0
        %v596 = vsel %vm555, %v524, 0
        %v599 = vsel %vm555, %v525, 0
        %v602 = vsel %vm555, %v526, 0
        %v605 = vsel %vm555, %v527, 0
        %v608 = vsel %vm555, %v528, 0
        %v611 = vsel %vm555, %v529, 0
        %v614 = vsel %vm555, %v530, 0
        %v617 = vsel %vm555, %v531, 0
        %v620 = vsel %vm555, %v532, 0
        %v623 = vsel %vm555, %v533, 0
        %v626 = vsel %vm555, %v534, 0
        %v629 = vsel %vm555, %v535, 0
        %v632 = vsel %vm555, %v536, 0
        %v635 = vsel %vm555, %v537, 0
        %v638 = vsel %vm555, %v538, 0
        %v641 = vsel %vm555, %v539, 0
        %v644 = vsel %vm555, %v540, 0
        %v647 = vsel %vm555, %v541, 0
        %v650 = vsel %vm555, %v542, 0
        %652 = vmatprep.subr.bf16.mxu0 0
        %653 = vmatpush1.bf16.msra.mxu0 %v551
        %654 = vmatprep.subr.bf16.mxu0 0
        %655 = vmatpush1.bf16.msra.mxu0 %v552
        %656 = vmatprep.subr.bf16.mxu0 0
        %657 = vmatpush1.bf16.msra.mxu0 0
        %658 = vmatprep.subr.bf16.mxu0 0
        %659 = vmatpush1.bf16.msra.mxu0 0
        %660 = vmatprep.subr.bf16.mxu0 0
        %661 = vmatpush1.bf16.msra.mxu0 0
        %662 = vmatprep.subr.bf16.mxu0 0
        %663 = vmatpush1.bf16.msra.mxu0 0
        %664 = vmatprep.subr.bf16.mxu0 0
        %665 = vmatpush1.bf16.msra.mxu0 0
        %666 = vmatprep.subr.bf16.mxu0 0
        %667 = vmatpush1.bf16.msra.mxu0 0
        %668 = vmatprep.subr.bf16.mxu0 0
        %669 = vmatpush1.bf16.msra.mxu0 0
        %670 = vmatprep.subr.bf16.mxu0 0
        %671 = vmatpush1.bf16.msra.mxu0 0
        %672 = vmatprep.subr.bf16.mxu0 0
        %673 = vmatpush1.bf16.msra.mxu0 0
        %674 = vmatprep.subr.bf16.mxu0 0
        %675 = vmatpush1.bf16.msra.mxu0 0
        %676 = vmatprep.subr.bf16.mxu0 0
        %677 = vmatpush1.bf16.msra.mxu0 0
        %678 = vmatprep.subr.bf16.mxu0 0
        %679 = vmatpush1.bf16.msra.mxu0 0
        %680 = vmatprep.subr.bf16.mxu0 0
        %681 = vmatpush1.bf16.msra.mxu0 0
        %682 = vmatprep.subr.bf16.mxu0 0
        %683 = vmatpush1.bf16.msra.mxu0 0
        %684 = vmatprep.mubr.bf16.mxu0 0
        %685 = vmatmul.mubr.bf16.gmra.mrb[0].mxu0 %v557
        %v686 = vpop.f32.mrb[0].mxu0
        %v687 = vadd.f32 %v381, %v686
        %v688 = vpop.f32.mrb[0].mxu0
        %v689 = vpop.f32.mrb[0].mxu0
        %v690 = vadd.f32 %v381, %v689
        %v691 = vpop.f32.mrb[0].mxu0
        %692 = vmatprep.mubr.bf16.mxu0 0
        %693 = vmatmul.mubr.bf16.gmra.mrb[0].mxu0 %v560
        %v694 = vpop.f32.mrb[0].mxu0
        %v695 = vadd.f32 %v381, %v694
        %v696 = vpop.f32.mrb[0].mxu0
        %v697 = vpop.f32.mrb[0].mxu0
        %v698 = vadd.f32 %v381, %v697
        %v699 = vpop.f32.mrb[0].mxu0
        %700 = vmatprep.mubr.bf16.mxu0 0
        %701 = vmatmul.mubr.bf16.gmra.mrb[0].mxu0 %v563
        %v702 = vpop.f32.mrb[0].mxu0
        %v703 = vadd.f32 %v381, %v702
        %v704 = vpop.f32.mrb[0].mxu0
        %v705 = vpop.f32.mrb[0].mxu0
        %v706 = vadd.f32 %v381, %v705
        %v707 = vpop.f32.mrb[0].mxu0
        %708 = vmatprep.mubr.bf16.mxu0 0
        %709 = vmatmul.mubr.bf16.gmra.mrb[0].mxu0 %v566
        %v710 = vpop.f32.mrb[0].mxu0
        %v711 = vadd.f32 %v381, %v710
        %v712 = vpop.f32.mrb[0].mxu0
        %v713 = vpop.f32.mrb[0].mxu0
        %v714 = vadd.f32 %v381, %v713
        %v715 = vpop.f32.mrb[0].mxu0
        %716 = vmatprep.mubr.bf16.mxu0 0
        %717 = vmatmul.mubr.bf16.gmra.mrb[0].mxu0 %v569
        %v718 = vpop.f32.mrb[0].mxu0
        %v719 = vadd.f32 %v381, %v718
        %v720 = vpop.f32.mrb[0].mxu0
        %v721 = vpop.f32.mrb[0].mxu0
        %v722 = vadd.f32 %v381, %v721
        %v723 = vpop.f32.mrb[0].mxu0
        %724 = vmatprep.mubr.bf16.mxu0 0
        %725 = vmatmul.mubr.bf16.gmra.mrb[0].mxu0 %v572
        %v726 = vpop.f32.mrb[0].mxu0
        %v727 = vadd.f32 %v381, %v726
        %v728 = vpop.f32.mrb[0].mxu0
        %v729 = vpop.f32.mrb[0].mxu0
        %v730 = vadd.f32 %v381, %v729
        %v731 = vpop.f32.mrb[0].mxu0
        %732 = vmatprep.mubr.bf16.mxu0 0
        %733 = vmatmul.mubr.bf16.gmra.mrb[0].mxu0 %v575
        %v734 = vpop.f32.mrb[0].mxu0
        %v735 = vadd.f32 %v381, %v734
        %v736 = vpop.f32.mrb[0].mxu0
        %v737 = vpop.f32.mrb[0].mxu0
        %v738 = vadd.f32 %v381, %v737
        %v739 = vpop.f32.mrb[0].mxu0
        %740 = vmatprep.mubr.bf16.mxu0 0
        %741 = vmatmul.mubr.bf16.gmra.mrb[0].mxu0 %v578
        %v742 = vpop.f32.mrb[0].mxu0
        %v743 = vadd.f32 %v381, %v742
        %v744 = vpop.f32.mrb[0].mxu0
        %v745 = vpop.f32.mrb[0].mxu0
        %v746 = vadd.f32 %v381, %v745
        %v747 = vpop.f32.mrb[0].mxu0
        %748 = vmatprep.mubr.bf16.mxu0 0
        %749 = vmatmul.mubr.bf16.gmra.mrb[0].mxu0 %v581
        %v750 = vpop.f32.mrb[0].mxu0
        %v751 = vadd.f32 %v381, %v750
        %v752 = vpop.f32.mrb[0].mxu0
        %v753 = vpop.f32.mrb[0].mxu0
        %v754 = vadd.f32 %v381, %v753
        %v755 = vpop.f32.mrb[0].mxu0
        %756 = vmatprep.mubr.bf16.mxu0 0
        %757 = vmatmul.mubr.bf16.gmra.mrb[0].mxu0 %v584
        %v758 = vpop.f32.mrb[0].mxu0
        %v759 = vadd.f32 %v381, %v758
        %v760 = vpop.f32.mrb[0].mxu0
        %v761 = vpop.f32.mrb[0].mxu0
        %v762 = vadd.f32 %v381, %v761
        %v763 = vpop.f32.mrb[0].mxu0
        %764 = vmatprep.mubr.bf16.mxu0 0
        %765 = vmatmul.mubr.bf16.gmra.mrb[0].mxu0 %v587
        %v766 = vpop.f32.mrb[0].mxu0
        %v767 = vadd.f32 %v381, %v766
        %v768 = vpop.f32.mrb[0].mxu0
        %v769 = vpop.f32.mrb[0].mxu0
        %v770 = vadd.f32 %v381, %v769
        %v771 = vpop.f32.mrb[0].mxu0
        %772 = vmatprep.mubr.bf16.mxu0 0
        %773 = vmatmul.mubr.bf16.gmra.mrb[0].mxu0 %v590
        %v774 = vpop.f32.mrb[0].mxu0
        %v775 = vadd.f32 %v381, %v774
        %v776 = vpop.f32.mrb[0].mxu0
        %v777 = vpop.f32.mrb[0].mxu0
        %v778 = vadd.f32 %v381, %v777
        %v779 = vpop.f32.mrb[0].mxu0
        %780 = vmatprep.mubr.bf16.mxu0 0
        %781 = vmatmul.mubr.bf16.gmra.mrb[0].mxu0 %v593
        %v782 = vpop.f32.mrb[0].mxu0
        %v783 = vadd.f32 %v381, %v782
        %v784 = vpop.f32.mrb[0].mxu0
        %v785 = vpop.f32.mrb[0].mxu0
        %v786 = vadd.f32 %v381, %v785
        %v787 = vpop.f32.mrb[0].mxu0
        %788 = vmatprep.mubr.bf16.mxu0 0
        %789 = vmatmul.mubr.bf16.gmra.mrb[0].mxu0 %v596
        %v790 = vpop.f32.mrb[0].mxu0
        %v791 = vadd.f32 %v381, %v790
        %v792 = vpop.f32.mrb[0].mxu0
        %v793 = vpop.f32.mrb[0].mxu0
        %v794 = vadd.f32 %v381, %v793
        %v795 = vpop.f32.mrb[0].mxu0
        %796 = vmatprep.mubr.bf16.mxu0 0
        %797 = vmatmul.mubr.bf16.gmra.mrb[0].mxu0 %v599
        %v798 = vpop.f32.mrb[0].mxu0
        %v799 = vadd.f32 %v381, %v798
        %v800 = vpop.f32.mrb[0].mxu0
        %v801 = vpop.f32.mrb[0].mxu0
        %v802 = vadd.f32 %v381, %v801
        %v803 = vpop.f32.mrb[0].mxu0
        %804 = vmatprep.mubr.bf16.mxu0 0
        %805 = vmatmul.mubr.bf16.gmra.mrb[0].mxu0 %v602
        %v806 = vpop.f32.mrb[0].mxu0
        %v807 = vadd.f32 %v381, %v806
        %v808 = vpop.f32.mrb[0].mxu0
        %v809 = vpop.f32.mrb[0].mxu0
        %v810 = vadd.f32 %v381, %v809
        %v811 = vpop.f32.mrb[0].mxu0
        %812 = vmatprep.mubr.bf16.mxu0 0
        %813 = vmatmul.mubr.bf16.gmra.mrb[0].mxu0 %v605
        %v814 = vpop.f32.mrb[0].mxu0
        %v815 = vadd.f32 %v381, %v814
        %v816 = vpop.f32.mrb[0].mxu0
        %v817 = vpop.f32.mrb[0].mxu0
        %v818 = vadd.f32 %v381, %v817
        %v819 = vpop.f32.mrb[0].mxu0
        %820 = vmatprep.mubr.bf16.mxu0 0
        %821 = vmatmul.mubr.bf16.gmra.mrb[0].mxu0 %v608
        %v822 = vpop.f32.mrb[0].mxu0
        %v823 = vadd.f32 %v381, %v822
        %v824 = vpop.f32.mrb[0].mxu0
        %v825 = vpop.f32.mrb[0].mxu0
        %v826 = vadd.f32 %v381, %v825
        %v827 = vpop.f32.mrb[0].mxu0
        %828 = vmatprep.mubr.bf16.mxu0 0
        %829 = vmatmul.mubr.bf16.gmra.mrb[0].mxu0 %v611
        %v830 = vpop.f32.mrb[0].mxu0
        %v831 = vadd.f32 %v381, %v830
        %v832 = vpop.f32.mrb[0].mxu0
        %v833 = vpop.f32.mrb[0].mxu0
        %v834 = vadd.f32 %v381, %v833
        %v835 = vpop.f32.mrb[0].mxu0
        %836 = vmatprep.mubr.bf16.mxu0 0
        %837 = vmatmul.mubr.bf16.gmra.mrb[0].mxu0 %v614
        %v838 = vpop.f32.mrb[0].mxu0
        %v839 = vadd.f32 %v381, %v838
        %v840 = vpop.f32.mrb[0].mxu0
        %v841 = vpop.f32.mrb[0].mxu0
        %v842 = vadd.f32 %v381, %v841
        %v843 = vpop.f32.mrb[0].mxu0
        %844 = vmatprep.mubr.bf16.mxu0 0
        %845 = vmatmul.mubr.bf16.gmra.mrb[0].mxu0 %v617
        %v846 = vpop.f32.mrb[0].mxu0
        %v847 = vadd.f32 %v381, %v846
        %v848 = vpop.f32.mrb[0].mxu0
        %v849 = vpop.f32.mrb[0].mxu0
        %v850 = vadd.f32 %v381, %v849
        %v851 = vpop.f32.mrb[0].mxu0
        %852 = vmatprep.mubr.bf16.mxu0 0
        %853 = vmatmul.mubr.bf16.gmra.mrb[0].mxu0 %v620
        %v854 = vpop.f32.mrb[0].mxu0
        %v855 = vadd.f32 %v381, %v854
        %v856 = vpop.f32.mrb[0].mxu0
        %v857 = vpop.f32.mrb[0].mxu0
        %v858 = vadd.f32 %v381, %v857
        %v859 = vpop.f32.mrb[0].mxu0
        %860 = vmatprep.mubr.bf16.mxu0 0
        %861 = vmatmul.mubr.bf16.gmra.mrb[0].mxu0 %v623
        %v862 = vpop.f32.mrb[0].mxu0
        %v863 = vadd.f32 %v381, %v862
        %v864 = vpop.f32.mrb[0].mxu0
        %v865 = vpop.f32.mrb[0].mxu0
        %v866 = vadd.f32 %v381, %v865
        %v867 = vpop.f32.mrb[0].mxu0
        %868 = vmatprep.mubr.bf16.mxu0 0
        %869 = vmatmul.mubr.bf16.gmra.mrb[0].mxu0 %v626
        %v870 = vpop.f32.mrb[0].mxu0
        %v871 = vadd.f32 %v381, %v870
        %v872 = vpop.f32.mrb[0].mxu0
        %v873 = vpop.f32.mrb[0].mxu0
        %v874 = vadd.f32 %v381, %v873
        %v875 = vpop.f32.mrb[0].mxu0
        %876 = vmatprep.mubr.bf16.mxu0 0
        %877 = vmatmul.mubr.bf16.gmra.mrb[0].mxu0 %v629
        %v878 = vpop.f32.mrb[0].mxu0
        %v879 = vadd.f32 %v381, %v878
        %v880 = vpop.f32.mrb[0].mxu0
        %v881 = vpop.f32.mrb[0].mxu0
        %v882 = vadd.f32 %v381, %v881
        %v883 = vpop.f32.mrb[0].mxu0
        %884 = vmatprep.mubr.bf16.mxu0 0
        %885 = vmatmul.mubr.bf16.gmra.mrb[0].mxu0 %v632
        %v886 = vpop.f32.mrb[0].mxu0
        %v887 = vadd.f32 %v381, %v886
        %v888 = vpop.f32.mrb[0].mxu0
        %v889 = vpop.f32.mrb[0].mxu0
        %v890 = vadd.f32 %v381, %v889
        %v891 = vpop.f32.mrb[0].mxu0
        %892 = vmatprep.mubr.bf16.mxu0 0
        %893 = vmatmul.mubr.bf16.gmra.mrb[0].mxu0 %v635
        %v894 = vpop.f32.mrb[0].mxu0
        %v895 = vadd.f32 %v381, %v894
        %v896 = vpop.f32.mrb[0].mxu0
        %v897 = vpop.f32.mrb[0].mxu0
        %v898 = vadd.f32 %v381, %v897
        %v899 = vpop.f32.mrb[0].mxu0
        %900 = vmatprep.mubr.bf16.mxu0 0
        %901 = vmatmul.mubr.bf16.gmra.mrb[0].mxu0 %v638
        %v902 = vpop.f32.mrb[0].mxu0
        %v903 = vadd.f32 %v381, %v902
        %v904 = vpop.f32.mrb[0].mxu0
        %v905 = vpop.f32.mrb[0].mxu0
        %v906 = vadd.f32 %v381, %v905
        %v907 = vpop.f32.mrb[0].mxu0
        %908 = vmatprep.mubr.bf16.mxu0 0
        %909 = vmatmul.mubr.bf16.gmra.mrb[0].mxu0 %v641
        %v910 = vpop.f32.mrb[0].mxu0
        %v911 = vadd.f32 %v381, %v910
        %v912 = vpop.f32.mrb[0].mxu0
        %v913 = vpop.f32.mrb[0].mxu0
        %v914 = vadd.f32 %v381, %v913
        %v915 = vpop.f32.mrb[0].mxu0
        %916 = vmatprep.mubr.bf16.mxu0 0
        %917 = vmatmul.mubr.bf16.gmra.mrb[0].mxu0 %v644
        %v918 = vpop.f32.mrb[0].mxu0
        %v919 = vadd.f32 %v381, %v918
        %v920 = vpop.f32.mrb[0].mxu0
        %v921 = vpop.f32.mrb[0].mxu0
        %v922 = vadd.f32 %v381, %v921
        %v923 = vpop.f32.mrb[0].mxu0
        %924 = vmatprep.mubr.bf16.mxu0 0
        %925 = vmatmul.mubr.bf16.gmra.mrb[0].mxu0 %v647
        %v926 = vpop.f32.mrb[0].mxu0
        %v927 = vadd.f32 %v381, %v926
        %v928 = vpop.f32.mrb[0].mxu0
        %v929 = vpop.f32.mrb[0].mxu0
        %v930 = vadd.f32 %v381, %v929
        %v931 = vpop.f32.mrb[0].mxu0
        %932 = vmatprep.mubr.bf16.mxu0 0
        %933 = vmatmul.mubr.bf16.gmra.mrb[0].mxu0 %v650
        %v934 = vpop.f32.mrb[0].mxu0
        %v935 = vadd.f32 %v381, %v934
        %v936 = vpop.f32.mrb[0].mxu0
        %v937 = vpop.f32.mrb[0].mxu0
        %v938 = vadd.f32 %v381, %v937
        %v939 = vpop.f32.mrb[0].mxu0
        %940 = vdwg.mxu0
        %v941 = vmax.f32 %v687, 0.0
        %v942 = vmax.f32 %v690, 0.0
        %v943 = vmax.f32 %v695, 0.0
        %v944 = vmax.f32 %v698, 0.0
        %v945 = vmax.f32 %v703, 0.0
        %v946 = vmax.f32 %v706, 0.0
        %v947 = vmax.f32 %v711, 0.0
        %v948 = vmax.f32 %v714, 0.0
        %v949 = vmax.f32 %v719, 0.0
        %v950 = vmax.f32 %v722, 0.0
        %v951 = vmax.f32 %v727, 0.0
        %v952 = vmax.f32 %v730, 0.0
        %v953 = vmax.f32 %v735, 0.0
        %v954 = vmax.f32 %v738, 0.0
        %v955 = vmax.f32 %v743, 0.0
        %v956 = vmax.f32 %v746, 0.0
        %v957 = vmax.f32 %v751, 0.0
        %v958 = vmax.f32 %v754, 0.0
        %v959 = vmax.f32 %v759, 0.0
        %v960 = vmax.f32 %v762, 0.0
        %v961 = vmax.f32 %v767, 0.0
        %v962 = vmax.f32 %v770, 0.0
        %v963 = vmax.f32 %v775, 0.0
        %v964 = vmax.f32 %v778, 0.0
        %v965 = vmax.f32 %v783, 0.0
        %v966 = vmax.f32 %v786, 0.0
        %v967 = vmax.f32 %v791, 0.0
        %v968 = vmax.f32 %v794, 0.0
        %v969 = vmax.f32 %v799, 0.0
        %v970 = vmax.f32 %v802, 0.0
        %v971 = vmax.f32 %v807, 0.0
        %v972 = vmax.f32 %v810, 0.0
        %v973 = vmax.f32 %v815, 0.0
        %v974 = vmax.f32 %v818, 0.0
        %v975 = vmax.f32 %v823, 0.0
        %v976 = vmax.f32 %v826, 0.0
        %v977 = vmax.f32 %v831, 0.0
        %v978 = vmax.f32 %v834, 0.0
        %v979 = vmax.f32 %v839, 0.0
        %v980 = vmax.f32 %v842, 0.0
        %v981 = vmax.f32 %v847, 0.0
        %v982 = vmax.f32 %v850, 0.0
        %v983 = vmax.f32 %v855, 0.0
        %v984 = vmax.f32 %v858, 0.0
        %v985 = vmax.f32 %v863, 0.0
        %v986 = vmax.f32 %v866, 0.0
        %v987 = vmax.f32 %v871, 0.0
        %v988 = vmax.f32 %v874, 0.0
        %v989 = vmax.f32 %v879, 0.0
        %v990 = vmax.f32 %v882, 0.0
        %v991 = vmax.f32 %v887, 0.0
        %v992 = vmax.f32 %v890, 0.0
        %v993 = vmax.f32 %v895, 0.0
        %v994 = vmax.f32 %v898, 0.0
        %v995 = vmax.f32 %v903, 0.0
        %v996 = vmax.f32 %v906, 0.0
        %v997 = vmax.f32 %v911, 0.0
        %v998 = vmax.f32 %v914, 0.0
        %v999 = vmax.f32 %v919, 0.0
        %v1000 = vmax.f32 %v922, 0.0
        %v1001 = vmax.f32 %v927, 0.0
        %v1002 = vmax.f32 %v930, 0.0
        %v1003 = vmax.f32 %v935, 0.0
        %v1004 = vmax.f32 %v938, 0.0
        %v1005 = vpack.c.bf16 %v942, %v941
        %v1006 = vpack.c.bf16 %v944, %v943
        %v1007 = vpack.c.bf16 %v946, %v945
        %v1008 = vpack.c.bf16 %v948, %v947
        %v1009 = vpack.c.bf16 %v950, %v949
        %v1010 = vpack.c.bf16 %v952, %v951
        %v1011 = vpack.c.bf16 %v954, %v953
        %v1012 = vpack.c.bf16 %v956, %v955
        %v1013 = vpack.c.bf16 %v958, %v957
        %v1014 = vpack.c.bf16 %v960, %v959
        %v1015 = vpack.c.bf16 %v962, %v961
        %v1016 = vpack.c.bf16 %v964, %v963
        %v1017 = vpack.c.bf16 %v966, %v965
        %v1018 = vpack.c.bf16 %v968, %v967
        %v1019 = vpack.c.bf16 %v970, %v969
        %v1020 = vpack.c.bf16 %v972, %v971
        %v1021 = vpack.c.bf16 %v974, %v973
        %v1022 = vpack.c.bf16 %v976, %v975
        %v1023 = vpack.c.bf16 %v978, %v977
        %v1024 = vpack.c.bf16 %v980, %v979
        %v1025 = vpack.c.bf16 %v982, %v981
        %v1026 = vpack.c.bf16 %v984, %v983
        %v1027 = vpack.c.bf16 %v986, %v985
        %v1028 = vpack.c.bf16 %v988, %v987
        %v1029 = vpack.c.bf16 %v990, %v989
        %v1030 = vpack.c.bf16 %v992, %v991
        %v1031 = vpack.c.bf16 %v994, %v993
        %v1032 = vpack.c.bf16 %v996, %v995
        %v1033 = vpack.c.bf16 %v998, %v997
        %v1034 = vpack.c.bf16 %v1000, %v999
        %v1035 = vpack.c.bf16 %v1002, %v1001
        %v1036 = vpack.c.bf16 %v1004, %v1003
        %v1037 = vld [vmem:[%s3] sm:$0xf]
        %v1038 = vld [vmem:[%s3 + $0x4] sm:$0xf]
        %v1039 = vld [vmem:[%s3 + $0x8] sm:$0xf]
        %v1040 = vld [vmem:[%s3 + $0xc] sm:$0xf]
        %v1041 = vld [vmem:[%s3 + $0x10] sm:$0xf]
        %v1042 = vld [vmem:[%s3 + $0x14] sm:$0xf]
        %v1043 = vld [vmem:[%s3 + $0x18] sm:$0xf]
        %v1044 = vld [vmem:[%s3 + $0x1c] sm:$0xf]
        %v1045 = vld [vmem:[%s3 + $0x20] sm:$0xf]
        %v1046 = vld [vmem:[%s3 + $0x24] sm:$0xf]
        %v1047 = vld [vmem:[%s3 + $0x28] sm:$0xf]
        %v1048 = vld [vmem:[%s3 + $0x2c] sm:$0xf]
        %v1049 = vld [vmem:[%s3 + $0x30] sm:$0xf]
        %v1050 = vld [vmem:[%s3 + $0x34] sm:$0xf]
        %v1051 = vld [vmem:[%s3 + $0x38] sm:$0xf]
        %v1052 = vld [vmem:[%s3 + $0x3c] sm:$0xf]
        %v1053 = vld [vmem:[%s4] sm:$0x1]
        %v1055 = vlaneseq
        %v1056 = vshrl.u32 %v1055, 7
        %v1057 = vsub.s32 0, %v1056
        %v1058 = vrot.slane %v1053, %v1057
        %v1076 = vunpack.c.l.b16 %v1037
        %v1077 = vunpack.c.l.b16 %v1038
        %v1078 = vunpack.c.l.b16 %v1039
        %v1079 = vunpack.c.l.b16 %v1040
        %v1080 = vunpack.c.l.b16 %v1041
        %v1081 = vunpack.c.l.b16 %v1042
        %v1082 = vunpack.c.l.b16 %v1043
        %v1083 = vunpack.c.l.b16 %v1044
        %v1084 = vunpack.c.l.b16 %v1045
        %v1085 = vunpack.c.l.b16 %v1046
        %v1086 = vunpack.c.l.b16 %v1047
        %v1087 = vunpack.c.l.b16 %v1048
        %v1088 = vunpack.c.l.b16 %v1049
        %v1089 = vunpack.c.l.b16 %v1050
        %v1090 = vunpack.c.l.b16 %v1051
        %v1091 = vunpack.c.l.b16 %v1052
        %v1092 = vpack.c.b16 %v1077, %v1076
        %v1093 = vpack.c.b16 %v1079, %v1078
        %v1094 = vpack.c.b16 %v1081, %v1080
        %v1095 = vpack.c.b16 %v1083, %v1082
        %v1096 = vpack.c.b16 %v1085, %v1084
        %v1097 = vpack.c.b16 %v1087, %v1086
        %v1098 = vpack.c.b16 %v1089, %v1088
        %v1099 = vpack.c.b16 %v1091, %v1090
        %1108 = vmatprep.subr.bf16.mxu0 0
        %1109 = vmatpush1.bf16.msra.mxu0 %v1092
        %1110 = vmatprep.subr.bf16.mxu0 0
        %1111 = vmatpush1.bf16.msra.mxu0 %v1093
        %1112 = vmatprep.subr.bf16.mxu0 0
        %1113 = vmatpush1.bf16.msra.mxu0 %v1094
        %1114 = vmatprep.subr.bf16.mxu0 0
        %1115 = vmatpush1.bf16.msra.mxu0 %v1095
        %1116 = vmatprep.subr.bf16.mxu0 0
        %1117 = vmatpush1.bf16.msra.mxu0 %v1096
        %1118 = vmatprep.subr.bf16.mxu0 0
        %1119 = vmatpush1.bf16.msra.mxu0 %v1097
        %1120 = vmatprep.subr.bf16.mxu0 0
        %1121 = vmatpush1.bf16.msra.mxu0 %v1098
        %1122 = vmatprep.subr.bf16.mxu0 0
        %1123 = vmatpush1.bf16.msra.mxu0 %v1099
        %1124 = vmatprep.subr.bf16.mxu0 0
        %1125 = vmatpush1.bf16.msra.mxu0 0
        %1126 = vmatprep.subr.bf16.mxu0 0
        %1127 = vmatpush1.bf16.msra.mxu0 0
        %1128 = vmatprep.subr.bf16.mxu0 0
        %1129 = vmatpush1.bf16.msra.mxu0 0
        %1130 = vmatprep.subr.bf16.mxu0 0
        %1131 = vmatpush1.bf16.msra.mxu0 0
        %1132 = vmatprep.subr.bf16.mxu0 0
        %1133 = vmatpush1.bf16.msra.mxu0 0
        %1134 = vmatprep.subr.bf16.mxu0 0
        %1135 = vmatpush1.bf16.msra.mxu0 0
        %1136 = vmatprep.subr.bf16.mxu0 0
        %1137 = vmatpush1.bf16.msra.mxu0 0
        %1138 = vmatprep.subr.bf16.mxu0 0
        %1139 = vmatpush1.bf16.msra.mxu0 0
        %1140 = vmatprep.mubr.bf16.mxu0 0
        %1141 = vmatmul.mubr.bf16.gmra.mrb[0].mxu0 %v1005
        %v1142 = vpop.f32.mrb[0].mxu0
        %v1143 = vadd.f32 %v1058, %v1142
        %v1144 = vpop.f32.mrb[0].mxu0
        %v1145 = vpop.f32.mrb[0].mxu0
        %v1146 = vadd.f32 %v1058, %v1145
        %v1147 = vpop.f32.mrb[0].mxu0
        %1148 = vmatprep.mubr.bf16.mxu0 0
        %1149 = vmatmul.mubr.bf16.gmra.mrb[0].mxu0 %v1006
        %v1150 = vpop.f32.mrb[0].mxu0
        %v1151 = vadd.f32 %v1058, %v1150
        %v1152 = vpop.f32.mrb[0].mxu0
        %v1153 = vpop.f32.mrb[0].mxu0
        %v1154 = vadd.f32 %v1058, %v1153
        %v1155 = vpop.f32.mrb[0].mxu0
        %1156 = vmatprep.mubr.bf16.mxu0 0
        %1157 = vmatmul.mubr.bf16.gmra.mrb[0].mxu0 %v1007
        %v1158 = vpop.f32.mrb[0].mxu0
        %v1159 = vadd.f32 %v1058, %v1158
        %v1160 = vpop.f32.mrb[0].mxu0
        %v1161 = vpop.f32.mrb[0].mxu0
        %v1162 = vadd.f32 %v1058, %v1161
        %v1163 = vpop.f32.mrb[0].mxu0
        %1164 = vmatprep.mubr.bf16.mxu0 0
        %1165 = vmatmul.mubr.bf16.gmra.mrb[0].mxu0 %v1008
        %v1166 = vpop.f32.mrb[0].mxu0
        %v1167 = vadd.f32 %v1058, %v1166
        %v1168 = vpop.f32.mrb[0].mxu0
        %v1169 = vpop.f32.mrb[0].mxu0
        %v1170 = vadd.f32 %v1058, %v1169
        %v1171 = vpop.f32.mrb[0].mxu0
        %1172 = vmatprep.mubr.bf16.mxu0 0
        %1173 = vmatmul.mubr.bf16.gmra.mrb[0].mxu0 %v1009
        %v1174 = vpop.f32.mrb[0].mxu0
        %v1175 = vadd.f32 %v1058, %v1174
        %v1176 = vpop.f32.mrb[0].mxu0
        %v1177 = vpop.f32.mrb[0].mxu0
        %v1178 = vadd.f32 %v1058, %v1177
        %v1179 = vpop.f32.mrb[0].mxu0
        %1180 = vmatprep.mubr.bf16.mxu0 0
        %1181 = vmatmul.mubr.bf16.gmra.mrb[0].mxu0 %v1010
        %v1182 = vpop.f32.mrb[0].mxu0
        %v1183 = vadd.f32 %v1058, %v1182
        %v1184 = vpop.f32.mrb[0].mxu0
        %v1185 = vpop.f32.mrb[0].mxu0
        %v1186 = vadd.f32 %v1058, %v1185
        %v1187 = vpop.f32.mrb[0].mxu0
        %1188 = vmatprep.mubr.bf16.mxu0 0
        %1189 = vmatmul.mubr.bf16.gmra.mrb[0].mxu0 %v1011
        %v1190 = vpop.f32.mrb[0].mxu0
        %v1191 = vadd.f32 %v1058, %v1190
        %v1192 = vpop.f32.mrb[0].mxu0
        %v1193 = vpop.f32.mrb[0].mxu0
        %v1194 = vadd.f32 %v1058, %v1193
        %v1195 = vpop.f32.mrb[0].mxu0
        %1196 = vmatprep.mubr.bf16.mxu0 0
        %1197 = vmatmul.mubr.bf16.gmra.mrb[0].mxu0 %v1012
        %v1198 = vpop.f32.mrb[0].mxu0
        %v1199 = vadd.f32 %v1058, %v1198
        %v1200 = vpop.f32.mrb[0].mxu0
        %v1201 = vpop.f32.mrb[0].mxu0
        %v1202 = vadd.f32 %v1058, %v1201
        %v1203 = vpop.f32.mrb[0].mxu0
        %1204 = vmatprep.mubr.bf16.mxu0 0
        %1205 = vmatmul.mubr.bf16.gmra.mrb[0].mxu0 %v1013
        %v1206 = vpop.f32.mrb[0].mxu0
        %v1207 = vadd.f32 %v1058, %v1206
        %v1208 = vpop.f32.mrb[0].mxu0
        %v1209 = vpop.f32.mrb[0].mxu0
        %v1210 = vadd.f32 %v1058, %v1209
        %v1211 = vpop.f32.mrb[0].mxu0
        %1212 = vmatprep.mubr.bf16.mxu0 0
        %1213 = vmatmul.mubr.bf16.gmra.mrb[0].mxu0 %v1014
        %v1214 = vpop.f32.mrb[0].mxu0
        %v1215 = vadd.f32 %v1058, %v1214
        %v1216 = vpop.f32.mrb[0].mxu0
        %v1217 = vpop.f32.mrb[0].mxu0
        %v1218 = vadd.f32 %v1058, %v1217
        %v1219 = vpop.f32.mrb[0].mxu0
        %1220 = vmatprep.mubr.bf16.mxu0 0
        %1221 = vmatmul.mubr.bf16.gmra.mrb[0].mxu0 %v1015
        %v1222 = vpop.f32.mrb[0].mxu0
        %v1223 = vadd.f32 %v1058, %v1222
        %v1224 = vpop.f32.mrb[0].mxu0
        %v1225 = vpop.f32.mrb[0].mxu0
        %v1226 = vadd.f32 %v1058, %v1225
        %v1227 = vpop.f32.mrb[0].mxu0
        %1228 = vmatprep.mubr.bf16.mxu0 0
        %1229 = vmatmul.mubr.bf16.gmra.mrb[0].mxu0 %v1016
        %v1230 = vpop.f32.mrb[0].mxu0
        %v1231 = vadd.f32 %v1058, %v1230
        %v1232 = vpop.f32.mrb[0].mxu0
        %v1233 = vpop.f32.mrb[0].mxu0
        %v1234 = vadd.f32 %v1058, %v1233
        %v1235 = vpop.f32.mrb[0].mxu0
        %1236 = vmatprep.mubr.bf16.mxu0 0
        %1237 = vmatmul.mubr.bf16.gmra.mrb[0].mxu0 %v1017
        %v1238 = vpop.f32.mrb[0].mxu0
        %v1239 = vadd.f32 %v1058, %v1238
        %v1240 = vpop.f32.mrb[0].mxu0
        %v1241 = vpop.f32.mrb[0].mxu0
        %v1242 = vadd.f32 %v1058, %v1241
        %v1243 = vpop.f32.mrb[0].mxu0
        %1244 = vmatprep.mubr.bf16.mxu0 0
        %1245 = vmatmul.mubr.bf16.gmra.mrb[0].mxu0 %v1018
        %v1246 = vpop.f32.mrb[0].mxu0
        %v1247 = vadd.f32 %v1058, %v1246
        %v1248 = vpop.f32.mrb[0].mxu0
        %v1249 = vpop.f32.mrb[0].mxu0
        %v1250 = vadd.f32 %v1058, %v1249
        %v1251 = vpop.f32.mrb[0].mxu0
        %1252 = vmatprep.mubr.bf16.mxu0 0
        %1253 = vmatmul.mubr.bf16.gmra.mrb[0].mxu0 %v1019
        %v1254 = vpop.f32.mrb[0].mxu0
        %v1255 = vadd.f32 %v1058, %v1254
        %v1256 = vpop.f32.mrb[0].mxu0
        %v1257 = vpop.f32.mrb[0].mxu0
        %v1258 = vadd.f32 %v1058, %v1257
        %v1259 = vpop.f32.mrb[0].mxu0
        %1260 = vmatprep.mubr.bf16.mxu0 0
        %1261 = vmatmul.mubr.bf16.gmra.mrb[0].mxu0 %v1020
        %v1262 = vpop.f32.mrb[0].mxu0
        %v1263 = vadd.f32 %v1058, %v1262
        %v1264 = vpop.f32.mrb[0].mxu0
        %v1265 = vpop.f32.mrb[0].mxu0
        %v1266 = vadd.f32 %v1058, %v1265
        %v1267 = vpop.f32.mrb[0].mxu0
        %1268 = vmatprep.mubr.bf16.mxu0 0
        %1269 = vmatmul.mubr.bf16.gmra.mrb[0].mxu0 %v1021
        %v1270 = vpop.f32.mrb[0].mxu0
        %v1271 = vadd.f32 %v1058, %v1270
        %v1272 = vpop.f32.mrb[0].mxu0
        %v1273 = vpop.f32.mrb[0].mxu0
        %v1274 = vadd.f32 %v1058, %v1273
        %v1275 = vpop.f32.mrb[0].mxu0
        %1276 = vmatprep.mubr.bf16.mxu0 0
        %1277 = vmatmul.mubr.bf16.gmra.mrb[0].mxu0 %v1022
        %v1278 = vpop.f32.mrb[0].mxu0
        %v1279 = vadd.f32 %v1058, %v1278
        %v1280 = vpop.f32.mrb[0].mxu0
        %v1281 = vpop.f32.mrb[0].mxu0
        %v1282 = vadd.f32 %v1058, %v1281
        %v1283 = vpop.f32.mrb[0].mxu0
        %1284 = vmatprep.mubr.bf16.mxu0 0
        %1285 = vmatmul.mubr.bf16.gmra.mrb[0].mxu0 %v1023
        %v1286 = vpop.f32.mrb[0].mxu0
        %v1287 = vadd.f32 %v1058, %v1286
        %v1288 = vpop.f32.mrb[0].mxu0
        %v1289 = vpop.f32.mrb[0].mxu0
        %v1290 = vadd.f32 %v1058, %v1289
        %v1291 = vpop.f32.mrb[0].mxu0
        %1292 = vmatprep.mubr.bf16.mxu0 0
        %1293 = vmatmul.mubr.bf16.gmra.mrb[0].mxu0 %v1024
        %v1294 = vpop.f32.mrb[0].mxu0
        %v1295 = vadd.f32 %v1058, %v1294
        %v1296 = vpop.f32.mrb[0].mxu0
        %v1297 = vpop.f32.mrb[0].mxu0
        %v1298 = vadd.f32 %v1058, %v1297
        %v1299 = vpop.f32.mrb[0].mxu0
        %1300 = vmatprep.mubr.bf16.mxu0 0
        %1301 = vmatmul.mubr.bf16.gmra.mrb[0].mxu0 %v1025
        %v1302 = vpop.f32.mrb[0].mxu0
        %v1303 = vadd.f32 %v1058, %v1302
        %v1304 = vpop.f32.mrb[0].mxu0
        %v1305 = vpop.f32.mrb[0].mxu0
        %v1306 = vadd.f32 %v1058, %v1305
        %v1307 = vpop.f32.mrb[0].mxu0
        %1308 = vmatprep.mubr.bf16.mxu0 0
        %1309 = vmatmul.mubr.bf16.gmra.mrb[0].mxu0 %v1026
        %v1310 = vpop.f32.mrb[0].mxu0
        %v1311 = vadd.f32 %v1058, %v1310
        %v1312 = vpop.f32.mrb[0].mxu0
        %v1313 = vpop.f32.mrb[0].mxu0
        %v1314 = vadd.f32 %v1058, %v1313
        %v1315 = vpop.f32.mrb[0].mxu0
        %1316 = vmatprep.mubr.bf16.mxu0 0
        %1317 = vmatmul.mubr.bf16.gmra.mrb[0].mxu0 %v1027
        %v1318 = vpop.f32.mrb[0].mxu0
        %v1319 = vadd.f32 %v1058, %v1318
        %v1320 = vpop.f32.mrb[0].mxu0
        %v1321 = vpop.f32.mrb[0].mxu0
        %v1322 = vadd.f32 %v1058, %v1321
        %v1323 = vpop.f32.mrb[0].mxu0
        %1324 = vmatprep.mubr.bf16.mxu0 0
        %1325 = vmatmul.mubr.bf16.gmra.mrb[0].mxu0 %v1028
        %v1326 = vpop.f32.mrb[0].mxu0
        %v1327 = vadd.f32 %v1058, %v1326
        %v1328 = vpop.f32.mrb[0].mxu0
        %v1329 = vpop.f32.mrb[0].mxu0
        %v1330 = vadd.f32 %v1058, %v1329
        %v1331 = vpop.f32.mrb[0].mxu0
        %1332 = vmatprep.mubr.bf16.mxu0 0
        %1333 = vmatmul.mubr.bf16.gmra.mrb[0].mxu0 %v1029
        %v1334 = vpop.f32.mrb[0].mxu0
        %v1335 = vadd.f32 %v1058, %v1334
        %v1336 = vpop.f32.mrb[0].mxu0
        %v1337 = vpop.f32.mrb[0].mxu0
        %v1338 = vadd.f32 %v1058, %v1337
        %v1339 = vpop.f32.mrb[0].mxu0
        %1340 = vmatprep.mubr.bf16.mxu0 0
        %1341 = vmatmul.mubr.bf16.gmra.mrb[0].mxu0 %v1030
        %v1342 = vpop.f32.mrb[0].mxu0
        %v1343 = vadd.f32 %v1058, %v1342
        %v1344 = vpop.f32.mrb[0].mxu0
        %v1345 = vpop.f32.mrb[0].mxu0
        %v1346 = vadd.f32 %v1058, %v1345
        %v1347 = vpop.f32.mrb[0].mxu0
        %1348 = vmatprep.mubr.bf16.mxu0 0
        %1349 = vmatmul.mubr.bf16.gmra.mrb[0].mxu0 %v1031
        %v1350 = vpop.f32.mrb[0].mxu0
        %v1351 = vadd.f32 %v1058, %v1350
        %v1352 = vpop.f32.mrb[0].mxu0
        %v1353 = vpop.f32.mrb[0].mxu0
        %v1354 = vadd.f32 %v1058, %v1353
        %v1355 = vpop.f32.mrb[0].mxu0
        %1356 = vmatprep.mubr.bf16.mxu0 0
        %1357 = vmatmul.mubr.bf16.gmra.mrb[0].mxu0 %v1032
        %v1358 = vpop.f32.mrb[0].mxu0
        %v1359 = vadd.f32 %v1058, %v1358
        %v1360 = vpop.f32.mrb[0].mxu0
        %v1361 = vpop.f32.mrb[0].mxu0
        %v1362 = vadd.f32 %v1058, %v1361
        %v1363 = vpop.f32.mrb[0].mxu0
        %1364 = vmatprep.mubr.bf16.mxu0 0
        %1365 = vmatmul.mubr.bf16.gmra.mrb[0].mxu0 %v1033
        %v1366 = vpop.f32.mrb[0].mxu0
        %v1367 = vadd.f32 %v1058, %v1366
        %v1368 = vpop.f32.mrb[0].mxu0
        %v1369 = vpop.f32.mrb[0].mxu0
        %v1370 = vadd.f32 %v1058, %v1369
        %v1371 = vpop.f32.mrb[0].mxu0
        %1372 = vmatprep.mubr.bf16.mxu0 0
        %1373 = vmatmul.mubr.bf16.gmra.mrb[0].mxu0 %v1034
        %v1374 = vpop.f32.mrb[0].mxu0
        %v1375 = vadd.f32 %v1058, %v1374
        %v1376 = vpop.f32.mrb[0].mxu0
        %v1377 = vpop.f32.mrb[0].mxu0
        %v1378 = vadd.f32 %v1058, %v1377
        %v1379 = vpop.f32.mrb[0].mxu0
        %1380 = vmatprep.mubr.bf16.mxu0 0
        %1381 = vmatmul.mubr.bf16.gmra.mrb[0].mxu0 %v1035
        %v1382 = vpop.f32.mrb[0].mxu0
        %v1383 = vadd.f32 %v1058, %v1382
        %v1384 = vpop.f32.mrb[0].mxu0
        %v1385 = vpop.f32.mrb[0].mxu0
        %v1386 = vadd.f32 %v1058, %v1385
        %v1387 = vpop.f32.mrb[0].mxu0
        %1388 = vmatprep.mubr.bf16.mxu0 0
        %1389 = vmatmul.mubr.bf16.gmra.mrb[0].mxu0 %v1036
        %v1390 = vpop.f32.mrb[0].mxu0
        %v1391 = vadd.f32 %v1058, %v1390
        %v1392 = vpop.f32.mrb[0].mxu0
        %v1393 = vpop.f32.mrb[0].mxu0
        %v1394 = vadd.f32 %v1058, %v1393
        %v1395 = vpop.f32.mrb[0].mxu0
        %1396 = vdwg.mxu0
        %v1397 = vmax.f32 %v1143, 0.0
        %v1398 = vmax.f32 %v1146, 0.0
        %v1399 = vmax.f32 %v1151, 0.0
        %v1400 = vmax.f32 %v1154, 0.0
        %v1401 = vmax.f32 %v1159, 0.0
        %v1402 = vmax.f32 %v1162, 0.0
        %v1403 = vmax.f32 %v1167, 0.0
        %v1404 = vmax.f32 %v1170, 0.0
        %v1405 = vmax.f32 %v1175, 0.0
        %v1406 = vmax.f32 %v1178, 0.0
        %v1407 = vmax.f32 %v1183, 0.0
        %v1408 = vmax.f32 %v1186, 0.0
        %v1409 = vmax.f32 %v1191, 0.0
        %v1410 = vmax.f32 %v1194, 0.0
        %v1411 = vmax.f32 %v1199, 0.0
        %v1412 = vmax.f32 %v1202, 0.0
        %v1413 = vmax.f32 %v1207, 0.0
        %v1414 = vmax.f32 %v1210, 0.0
        %v1415 = vmax.f32 %v1215, 0.0
        %v1416 = vmax.f32 %v1218, 0.0
        %v1417 = vmax.f32 %v1223, 0.0
        %v1418 = vmax.f32 %v1226, 0.0
        %v1419 = vmax.f32 %v1231, 0.0
        %v1420 = vmax.f32 %v1234, 0.0
        %v1421 = vmax.f32 %v1239, 0.0
        %v1422 = vmax.f32 %v1242, 0.0
        %v1423 = vmax.f32 %v1247, 0.0
        %v1424 = vmax.f32 %v1250, 0.0
        %v1425 = vmax.f32 %v1255, 0.0
        %v1426 = vmax.f32 %v1258, 0.0
        %v1427 = vmax.f32 %v1263, 0.0
        %v1428 = vmax.f32 %v1266, 0.0
        %v1429 = vmax.f32 %v1271, 0.0
        %v1430 = vmax.f32 %v1274, 0.0
        %v1431 = vmax.f32 %v1279, 0.0
        %v1432 = vmax.f32 %v1282, 0.0
        %v1433 = vmax.f32 %v1287, 0.0
        %v1434 = vmax.f32 %v1290, 0.0
        %v1435 = vmax.f32 %v1295, 0.0
        %v1436 = vmax.f32 %v1298, 0.0
        %v1437 = vmax.f32 %v1303, 0.0
        %v1438 = vmax.f32 %v1306, 0.0
        %v1439 = vmax.f32 %v1311, 0.0
        %v1440 = vmax.f32 %v1314, 0.0
        %v1441 = vmax.f32 %v1319, 0.0
        %v1442 = vmax.f32 %v1322, 0.0
        %v1443 = vmax.f32 %v1327, 0.0
        %v1444 = vmax.f32 %v1330, 0.0
        %v1445 = vmax.f32 %v1335, 0.0
        %v1446 = vmax.f32 %v1338, 0.0
        %v1447 = vmax.f32 %v1343, 0.0
        %v1448 = vmax.f32 %v1346, 0.0
        %v1449 = vmax.f32 %v1351, 0.0
        %v1450 = vmax.f32 %v1354, 0.0
        %v1451 = vmax.f32 %v1359, 0.0
        %v1452 = vmax.f32 %v1362, 0.0
        %v1453 = vmax.f32 %v1367, 0.0
        %v1454 = vmax.f32 %v1370, 0.0
        %v1455 = vmax.f32 %v1375, 0.0
        %v1456 = vmax.f32 %v1378, 0.0
        %v1457 = vmax.f32 %v1383, 0.0
        %v1458 = vmax.f32 %v1386, 0.0
        %v1459 = vmax.f32 %v1391, 0.0
        %v1460 = vmax.f32 %v1394, 0.0
        %v1461 = vld [vmem:[%s5] sm:$0xff]
        %v1462 = vld [vmem:[%s5 + $0x8] sm:$0xff]
        %v1463 = vld [vmem:[%s5 + $0x10] sm:$0xff]
        %v1464 = vld [vmem:[%s5 + $0x18] sm:$0xff]
        %v1465 = vld [vmem:[%s5 + $0x20] sm:$0xff]
        %v1466 = vld [vmem:[%s5 + $0x28] sm:$0xff]
        %v1467 = vld [vmem:[%s5 + $0x30] sm:$0xff]
        %v1468 = vld [vmem:[%s5 + $0x38] sm:$0xff]
        %v1469 = vld [vmem:[%s5 + $0x40] sm:$0xff]
        %v1470 = vld [vmem:[%s5 + $0x48] sm:$0xff]
        %v1471 = vld [vmem:[%s5 + $0x50] sm:$0xff]
        %v1472 = vld [vmem:[%s5 + $0x58] sm:$0xff]
        %v1473 = vld [vmem:[%s5 + $0x60] sm:$0xff]
        %v1474 = vld [vmem:[%s5 + $0x68] sm:$0xff]
        %v1475 = vld [vmem:[%s5 + $0x70] sm:$0xff]
        %v1476 = vld [vmem:[%s5 + $0x78] sm:$0xff]
        %1477 = vmatprep.subr.mxu0 0.0
        %1478 = vmatpush1.msra.mxu0 %v1461
        %1479 = vmatprep.subr.mxu0 0.0
        %1480 = vmatpush1.msra.mxu0 %v1462
        %1481 = vmatprep.subr.mxu0 0.0
        %1482 = vmatpush1.msra.mxu0 %v1463
        %1483 = vmatprep.subr.mxu0 0.0
        %1484 = vmatpush1.msra.mxu0 %v1464
        %1485 = vmatprep.subr.mxu0 0.0
        %1486 = vmatpush1.msra.mxu0 %v1465
        %1487 = vmatprep.subr.mxu0 0.0
        %1488 = vmatpush1.msra.mxu0 %v1466
        %1489 = vmatprep.subr.mxu0 0.0
        %1490 = vmatpush1.msra.mxu0 %v1467
        %1491 = vmatprep.subr.mxu0 0.0
        %1492 = vmatpush1.msra.mxu0 %v1468
        %1493 = vmatprep.subr.mxu0 0.0
        %1494 = vmatpush1.msra.mxu0 %v1469
        %1495 = vmatprep.subr.mxu0 0.0
        %1496 = vmatpush1.msra.mxu0 %v1470
        %1497 = vmatprep.subr.mxu0 0.0
        %1498 = vmatpush1.msra.mxu0 %v1471
        %1499 = vmatprep.subr.mxu0 0.0
        %1500 = vmatpush1.msra.mxu0 %v1472
        %1501 = vmatprep.subr.mxu0 0.0
        %1502 = vmatpush1.msra.mxu0 %v1473
        %1503 = vmatprep.subr.mxu0 0.0
        %1504 = vmatpush1.msra.mxu0 %v1474
        %1505 = vmatprep.subr.mxu0 0.0
        %1506 = vmatpush1.msra.mxu0 %v1475
        %1507 = vmatprep.subr.mxu0 0.0
        %1508 = vmatpush1.msra.mxu0 %v1476
        %1509 = vmatprep.subr.mxu0 0.0
        %1510 = vmatpush1.msra.mxu0 0.0
        %1511 = vmatprep.subr.mxu0 0.0
        %1512 = vmatpush1.msra.mxu0 0.0
        %1513 = vmatprep.subr.mxu0 0.0
        %1514 = vmatpush1.msra.mxu0 0.0
        %1515 = vmatprep.subr.mxu0 0.0
        %1516 = vmatpush1.msra.mxu0 0.0
        %1517 = vmatprep.subr.mxu0 0.0
        %1518 = vmatpush1.msra.mxu0 0.0
        %1519 = vmatprep.subr.mxu0 0.0
        %1520 = vmatpush1.msra.mxu0 0.0
        %1521 = vmatprep.subr.mxu0 0.0
        %1522 = vmatpush1.msra.mxu0 0.0
        %1523 = vmatprep.subr.mxu0 0.0
        %1524 = vmatpush1.msra.mxu0 0.0
        %1525 = vmatprep.subr.mxu0 0.0
        %1526 = vmatpush1.msra.mxu0 0.0
        %1527 = vmatprep.subr.mxu0 0.0
        %1528 = vmatpush1.msra.mxu0 0.0
        %1529 = vmatprep.subr.mxu0 0.0
        %1530 = vmatpush1.msra.mxu0 0.0
        %1531 = vmatprep.subr.mxu0 0.0
        %1532 = vmatpush1.msra.mxu0 0.0
        %1533 = vmatprep.subr.mxu0 0.0
        %1534 = vmatpush1.msra.mxu0 0.0
        %1535 = vmatprep.subr.mxu0 0.0
        %1536 = vmatpush1.msra.mxu0 0.0
        %1537 = vmatprep.subr.mxu0 0.0
        %1538 = vmatpush1.msra.mxu0 0.0
        %1539 = vmatprep.subr.mxu0 0.0
        %1540 = vmatpush1.msra.mxu0 0.0
        %1541 = vmatprep.mubr.f32.mxu0 0.0
        %1542 = vmatmul.mubr.f32.gmra.mrb[0].mxu0 %v1397
        %v1543 = vpop.f32.mrb[0].mxu0
        %v1544 = vadd.f32 0.0, %v1543
        %v1545 = vpop.f32.mrb[0].mxu0
        %1546 = vmatprep.mubr.f32.mxu0 0.0
        %1547 = vmatmul.mubr.f32.gmra.mrb[0].mxu0 %v1398
        %v1548 = vpop.f32.mrb[0].mxu0
        %v1549 = vadd.f32 0.0, %v1548
        %v1550 = vpop.f32.mrb[0].mxu0
        %1551 = vmatprep.mubr.f32.mxu0 0.0
        %1552 = vmatmul.mubr.f32.gmra.mrb[0].mxu0 %v1399
        %v1553 = vpop.f32.mrb[0].mxu0
        %v1554 = vadd.f32 0.0, %v1553
        %v1555 = vpop.f32.mrb[0].mxu0
        %1556 = vmatprep.mubr.f32.mxu0 0.0
        %1557 = vmatmul.mubr.f32.gmra.mrb[0].mxu0 %v1400
        %v1558 = vpop.f32.mrb[0].mxu0
        %v1559 = vadd.f32 0.0, %v1558
        %v1560 = vpop.f32.mrb[0].mxu0
        %1561 = vmatprep.mubr.f32.mxu0 0.0
        %1562 = vmatmul.mubr.f32.gmra.mrb[0].mxu0 %v1401
        %v1563 = vpop.f32.mrb[0].mxu0
        %v1564 = vadd.f32 0.0, %v1563
        %v1565 = vpop.f32.mrb[0].mxu0
        %1566 = vmatprep.mubr.f32.mxu0 0.0
        %1567 = vmatmul.mubr.f32.gmra.mrb[0].mxu0 %v1402
        %v1568 = vpop.f32.mrb[0].mxu0
        %v1569 = vadd.f32 0.0, %v1568
        %v1570 = vpop.f32.mrb[0].mxu0
        %1571 = vmatprep.mubr.f32.mxu0 0.0
        %1572 = vmatmul.mubr.f32.gmra.mrb[0].mxu0 %v1403
        %v1573 = vpop.f32.mrb[0].mxu0
        %v1574 = vadd.f32 0.0, %v1573
        %v1575 = vpop.f32.mrb[0].mxu0
        %1576 = vmatprep.mubr.f32.mxu0 0.0
        %1577 = vmatmul.mubr.f32.gmra.mrb[0].mxu0 %v1404
        %v1578 = vpop.f32.mrb[0].mxu0
        %v1579 = vadd.f32 0.0, %v1578
        %v1580 = vpop.f32.mrb[0].mxu0
        %1581 = vmatprep.mubr.f32.mxu0 0.0
        %1582 = vmatmul.mubr.f32.gmra.mrb[0].mxu0 %v1405
        %v1583 = vpop.f32.mrb[0].mxu0
        %v1584 = vadd.f32 0.0, %v1583
        %v1585 = vpop.f32.mrb[0].mxu0
        %1586 = vmatprep.mubr.f32.mxu0 0.0
        %1587 = vmatmul.mubr.f32.gmra.mrb[0].mxu0 %v1406
        %v1588 = vpop.f32.mrb[0].mxu0
        %v1589 = vadd.f32 0.0, %v1588
        %v1590 = vpop.f32.mrb[0].mxu0
        %1591 = vmatprep.mubr.f32.mxu0 0.0
        %1592 = vmatmul.mubr.f32.gmra.mrb[0].mxu0 %v1407
        %v1593 = vpop.f32.mrb[0].mxu0
        %v1594 = vadd.f32 0.0, %v1593
        %v1595 = vpop.f32.mrb[0].mxu0
        %1596 = vmatprep.mubr.f32.mxu0 0.0
        %1597 = vmatmul.mubr.f32.gmra.mrb[0].mxu0 %v1408
        %v1598 = vpop.f32.mrb[0].mxu0
        %v1599 = vadd.f32 0.0, %v1598
        %v1600 = vpop.f32.mrb[0].mxu0
        %1601 = vmatprep.mubr.f32.mxu0 0.0
        %1602 = vmatmul.mubr.f32.gmra.mrb[0].mxu0 %v1409
        %v1603 = vpop.f32.mrb[0].mxu0
        %v1604 = vadd.f32 0.0, %v1603
        %v1605 = vpop.f32.mrb[0].mxu0
        %1606 = vmatprep.mubr.f32.mxu0 0.0
        %1607 = vmatmul.mubr.f32.gmra.mrb[0].mxu0 %v1410
        %v1608 = vpop.f32.mrb[0].mxu0
        %v1609 = vadd.f32 0.0, %v1608
        %v1610 = vpop.f32.mrb[0].mxu0
        %1611 = vmatprep.mubr.f32.mxu0 0.0
        %1612 = vmatmul.mubr.f32.gmra.mrb[0].mxu0 %v1411
        %v1613 = vpop.f32.mrb[0].mxu0
        %v1614 = vadd.f32 0.0, %v1613
        %v1615 = vpop.f32.mrb[0].mxu0
        %1616 = vmatprep.mubr.f32.mxu0 0.0
        %1617 = vmatmul.mubr.f32.gmra.mrb[0].mxu0 %v1412
        %v1618 = vpop.f32.mrb[0].mxu0
        %v1619 = vadd.f32 0.0, %v1618
        %v1620 = vpop.f32.mrb[0].mxu0
        %1621 = vmatprep.mubr.f32.mxu0 0.0
        %1622 = vmatmul.mubr.f32.gmra.mrb[0].mxu0 %v1413
        %v1623 = vpop.f32.mrb[0].mxu0
        %v1624 = vadd.f32 0.0, %v1623
        %v1625 = vpop.f32.mrb[0].mxu0
        %1626 = vmatprep.mubr.f32.mxu0 0.0
        %1627 = vmatmul.mubr.f32.gmra.mrb[0].mxu0 %v1414
        %v1628 = vpop.f32.mrb[0].mxu0
        %v1629 = vadd.f32 0.0, %v1628
        %v1630 = vpop.f32.mrb[0].mxu0
        %1631 = vmatprep.mubr.f32.mxu0 0.0
        %1632 = vmatmul.mubr.f32.gmra.mrb[0].mxu0 %v1415
        %v1633 = vpop.f32.mrb[0].mxu0
        %v1634 = vadd.f32 0.0, %v1633
        %v1635 = vpop.f32.mrb[0].mxu0
        %1636 = vmatprep.mubr.f32.mxu0 0.0
        %1637 = vmatmul.mubr.f32.gmra.mrb[0].mxu0 %v1416
        %v1638 = vpop.f32.mrb[0].mxu0
        %v1639 = vadd.f32 0.0, %v1638
        %v1640 = vpop.f32.mrb[0].mxu0
        %1641 = vmatprep.mubr.f32.mxu0 0.0
        %1642 = vmatmul.mubr.f32.gmra.mrb[0].mxu0 %v1417
        %v1643 = vpop.f32.mrb[0].mxu0
        %v1644 = vadd.f32 0.0, %v1643
        %v1645 = vpop.f32.mrb[0].mxu0
        %1646 = vmatprep.mubr.f32.mxu0 0.0
        %1647 = vmatmul.mubr.f32.gmra.mrb[0].mxu0 %v1418
        %v1648 = vpop.f32.mrb[0].mxu0
        %v1649 = vadd.f32 0.0, %v1648
        %v1650 = vpop.f32.mrb[0].mxu0
        %1651 = vmatprep.mubr.f32.mxu0 0.0
        %1652 = vmatmul.mubr.f32.gmra.mrb[0].mxu0 %v1419
        %v1653 = vpop.f32.mrb[0].mxu0
        %v1654 = vadd.f32 0.0, %v1653
        %v1655 = vpop.f32.mrb[0].mxu0
        %1656 = vmatprep.mubr.f32.mxu0 0.0
        %1657 = vmatmul.mubr.f32.gmra.mrb[0].mxu0 %v1420
        %v1658 = vpop.f32.mrb[0].mxu0
        %v1659 = vadd.f32 0.0, %v1658
        %v1660 = vpop.f32.mrb[0].mxu0
        %1661 = vmatprep.mubr.f32.mxu0 0.0
        %1662 = vmatmul.mubr.f32.gmra.mrb[0].mxu0 %v1421
        %v1663 = vpop.f32.mrb[0].mxu0
        %v1664 = vadd.f32 0.0, %v1663
        %v1665 = vpop.f32.mrb[0].mxu0
        %1666 = vmatprep.mubr.f32.mxu0 0.0
        %1667 = vmatmul.mubr.f32.gmra.mrb[0].mxu0 %v1422
        %v1668 = vpop.f32.mrb[0].mxu0
        %v1669 = vadd.f32 0.0, %v1668
        %v1670 = vpop.f32.mrb[0].mxu0
        %1671 = vmatprep.mubr.f32.mxu0 0.0
        %1672 = vmatmul.mubr.f32.gmra.mrb[0].mxu0 %v1423
        %v1673 = vpop.f32.mrb[0].mxu0
        %v1674 = vadd.f32 0.0, %v1673
        %v1675 = vpop.f32.mrb[0].mxu0
        %1676 = vmatprep.mubr.f32.mxu0 0.0
        %1677 = vmatmul.mubr.f32.gmra.mrb[0].mxu0 %v1424
        %v1678 = vpop.f32.mrb[0].mxu0
        %v1679 = vadd.f32 0.0, %v1678
        %v1680 = vpop.f32.mrb[0].mxu0
        %1681 = vmatprep.mubr.f32.mxu0 0.0
        %1682 = vmatmul.mubr.f32.gmra.mrb[0].mxu0 %v1425
        %v1683 = vpop.f32.mrb[0].mxu0
        %v1684 = vadd.f32 0.0, %v1683
        %v1685 = vpop.f32.mrb[0].mxu0
        %1686 = vmatprep.mubr.f32.mxu0 0.0
        %1687 = vmatmul.mubr.f32.gmra.mrb[0].mxu0 %v1426
        %v1688 = vpop.f32.mrb[0].mxu0
        %v1689 = vadd.f32 0.0, %v1688
        %v1690 = vpop.f32.mrb[0].mxu0
        %1691 = vmatprep.mubr.f32.mxu0 0.0
        %1692 = vmatmul.mubr.f32.gmra.mrb[0].mxu0 %v1427
        %v1693 = vpop.f32.mrb[0].mxu0
        %v1694 = vadd.f32 0.0, %v1693
        %v1695 = vpop.f32.mrb[0].mxu0
        %1696 = vmatprep.mubr.f32.mxu0 0.0
        %1697 = vmatmul.mubr.f32.gmra.mrb[0].mxu0 %v1428
        %v1698 = vpop.f32.mrb[0].mxu0
        %v1699 = vadd.f32 0.0, %v1698
        %v1700 = vpop.f32.mrb[0].mxu0
        %1701 = vmatprep.mubr.f32.mxu0 0.0
        %1702 = vmatmul.mubr.f32.gmra.mrb[0].mxu0 %v1429
        %v1703 = vpop.f32.mrb[0].mxu0
        %v1704 = vadd.f32 0.0, %v1703
        %v1705 = vpop.f32.mrb[0].mxu0
        %1706 = vmatprep.mubr.f32.mxu0 0.0
        %1707 = vmatmul.mubr.f32.gmra.mrb[0].mxu0 %v1430
        %v1708 = vpop.f32.mrb[0].mxu0
        %v1709 = vadd.f32 0.0, %v1708
        %v1710 = vpop.f32.mrb[0].mxu0
        %1711 = vmatprep.mubr.f32.mxu0 0.0
        %1712 = vmatmul.mubr.f32.gmra.mrb[0].mxu0 %v1431
        %v1713 = vpop.f32.mrb[0].mxu0
        %v1714 = vadd.f32 0.0, %v1713
        %v1715 = vpop.f32.mrb[0].mxu0
        %1716 = vmatprep.mubr.f32.mxu0 0.0
        %1717 = vmatmul.mubr.f32.gmra.mrb[0].mxu0 %v1432
        %v1718 = vpop.f32.mrb[0].mxu0
        %v1719 = vadd.f32 0.0, %v1718
        %v1720 = vpop.f32.mrb[0].mxu0
        %1721 = vmatprep.mubr.f32.mxu0 0.0
        %1722 = vmatmul.mubr.f32.gmra.mrb[0].mxu0 %v1433
        %v1723 = vpop.f32.mrb[0].mxu0
        %v1724 = vadd.f32 0.0, %v1723
        %v1725 = vpop.f32.mrb[0].mxu0
        %1726 = vmatprep.mubr.f32.mxu0 0.0
        %1727 = vmatmul.mubr.f32.gmra.mrb[0].mxu0 %v1434
        %v1728 = vpop.f32.mrb[0].mxu0
        %v1729 = vadd.f32 0.0, %v1728
        %v1730 = vpop.f32.mrb[0].mxu0
        %1731 = vmatprep.mubr.f32.mxu0 0.0
        %1732 = vmatmul.mubr.f32.gmra.mrb[0].mxu0 %v1435
        %v1733 = vpop.f32.mrb[0].mxu0
        %v1734 = vadd.f32 0.0, %v1733
        %v1735 = vpop.f32.mrb[0].mxu0
        %1736 = vmatprep.mubr.f32.mxu0 0.0
        %1737 = vmatmul.mubr.f32.gmra.mrb[0].mxu0 %v1436
        %v1738 = vpop.f32.mrb[0].mxu0
        %v1739 = vadd.f32 0.0, %v1738
        %v1740 = vpop.f32.mrb[0].mxu0
        %1741 = vmatprep.mubr.f32.mxu0 0.0
        %1742 = vmatmul.mubr.f32.gmra.mrb[0].mxu0 %v1437
        %v1743 = vpop.f32.mrb[0].mxu0
        %v1744 = vadd.f32 0.0, %v1743
        %v1745 = vpop.f32.mrb[0].mxu0
        %1746 = vmatprep.mubr.f32.mxu0 0.0
        %1747 = vmatmul.mubr.f32.gmra.mrb[0].mxu0 %v1438
        %v1748 = vpop.f32.mrb[0].mxu0
        %v1749 = vadd.f32 0.0, %v1748
        %v1750 = vpop.f32.mrb[0].mxu0
        %1751 = vmatprep.mubr.f32.mxu0 0.0
        %1752 = vmatmul.mubr.f32.gmra.mrb[0].mxu0 %v1439
        %v1753 = vpop.f32.mrb[0].mxu0
        %v1754 = vadd.f32 0.0, %v1753
        %v1755 = vpop.f32.mrb[0].mxu0
        %1756 = vmatprep.mubr.f32.mxu0 0.0
        %1757 = vmatmul.mubr.f32.gmra.mrb[0].mxu0 %v1440
        %v1758 = vpop.f32.mrb[0].mxu0
        %v1759 = vadd.f32 0.0, %v1758
        %v1760 = vpop.f32.mrb[0].mxu0
        %1761 = vmatprep.mubr.f32.mxu0 0.0
        %1762 = vmatmul.mubr.f32.gmra.mrb[0].mxu0 %v1441
        %v1763 = vpop.f32.mrb[0].mxu0
        %v1764 = vadd.f32 0.0, %v1763
        %v1765 = vpop.f32.mrb[0].mxu0
        %1766 = vmatprep.mubr.f32.mxu0 0.0
        %1767 = vmatmul.mubr.f32.gmra.mrb[0].mxu0 %v1442
        %v1768 = vpop.f32.mrb[0].mxu0
        %v1769 = vadd.f32 0.0, %v1768
        %v1770 = vpop.f32.mrb[0].mxu0
        %1771 = vmatprep.mubr.f32.mxu0 0.0
        %1772 = vmatmul.mubr.f32.gmra.mrb[0].mxu0 %v1443
        %v1773 = vpop.f32.mrb[0].mxu0
        %v1774 = vadd.f32 0.0, %v1773
        %v1775 = vpop.f32.mrb[0].mxu0
        %1776 = vmatprep.mubr.f32.mxu0 0.0
        %1777 = vmatmul.mubr.f32.gmra.mrb[0].mxu0 %v1444
        %v1778 = vpop.f32.mrb[0].mxu0
        %v1779 = vadd.f32 0.0, %v1778
        %v1780 = vpop.f32.mrb[0].mxu0
        %1781 = vmatprep.mubr.f32.mxu0 0.0
        %1782 = vmatmul.mubr.f32.gmra.mrb[0].mxu0 %v1445
        %v1783 = vpop.f32.mrb[0].mxu0
        %v1784 = vadd.f32 0.0, %v1783
        %v1785 = vpop.f32.mrb[0].mxu0
        %1786 = vmatprep.mubr.f32.mxu0 0.0
        %1787 = vmatmul.mubr.f32.gmra.mrb[0].mxu0 %v1446
        %v1788 = vpop.f32.mrb[0].mxu0
        %v1789 = vadd.f32 0.0, %v1788
        %v1790 = vpop.f32.mrb[0].mxu0
        %1791 = vmatprep.mubr.f32.mxu0 0.0
        %1792 = vmatmul.mubr.f32.gmra.mrb[0].mxu0 %v1447
        %v1793 = vpop.f32.mrb[0].mxu0
        %v1794 = vadd.f32 0.0, %v1793
        %v1795 = vpop.f32.mrb[0].mxu0
        %1796 = vmatprep.mubr.f32.mxu0 0.0
        %1797 = vmatmul.mubr.f32.gmra.mrb[0].mxu0 %v1448
        %v1798 = vpop.f32.mrb[0].mxu0
        %v1799 = vadd.f32 0.0, %v1798
        %v1800 = vpop.f32.mrb[0].mxu0
        %1801 = vmatprep.mubr.f32.mxu0 0.0
        %1802 = vmatmul.mubr.f32.gmra.mrb[0].mxu0 %v1449
        %v1803 = vpop.f32.mrb[0].mxu0
        %v1804 = vadd.f32 0.0, %v1803
        %v1805 = vpop.f32.mrb[0].mxu0
        %1806 = vmatprep.mubr.f32.mxu0 0.0
        %1807 = vmatmul.mubr.f32.gmra.mrb[0].mxu0 %v1450
        %v1808 = vpop.f32.mrb[0].mxu0
        %v1809 = vadd.f32 0.0, %v1808
        %v1810 = vpop.f32.mrb[0].mxu0
        %1811 = vmatprep.mubr.f32.mxu0 0.0
        %1812 = vmatmul.mubr.f32.gmra.mrb[0].mxu0 %v1451
        %v1813 = vpop.f32.mrb[0].mxu0
        %v1814 = vadd.f32 0.0, %v1813
        %v1815 = vpop.f32.mrb[0].mxu0
        %1816 = vmatprep.mubr.f32.mxu0 0.0
        %1817 = vmatmul.mubr.f32.gmra.mrb[0].mxu0 %v1452
        %v1818 = vpop.f32.mrb[0].mxu0
        %v1819 = vadd.f32 0.0, %v1818
        %v1820 = vpop.f32.mrb[0].mxu0
        %1821 = vmatprep.mubr.f32.mxu0 0.0
        %1822 = vmatmul.mubr.f32.gmra.mrb[0].mxu0 %v1453
        %v1823 = vpop.f32.mrb[0].mxu0
        %v1824 = vadd.f32 0.0, %v1823
        %v1825 = vpop.f32.mrb[0].mxu0
        %1826 = vmatprep.mubr.f32.mxu0 0.0
        %1827 = vmatmul.mubr.f32.gmra.mrb[0].mxu0 %v1454
        %v1828 = vpop.f32.mrb[0].mxu0
        %v1829 = vadd.f32 0.0, %v1828
        %v1830 = vpop.f32.mrb[0].mxu0
        %1831 = vmatprep.mubr.f32.mxu0 0.0
        %1832 = vmatmul.mubr.f32.gmra.mrb[0].mxu0 %v1455
        %v1833 = vpop.f32.mrb[0].mxu0
        %v1834 = vadd.f32 0.0, %v1833
        %v1835 = vpop.f32.mrb[0].mxu0
        %1836 = vmatprep.mubr.f32.mxu0 0.0
        %1837 = vmatmul.mubr.f32.gmra.mrb[0].mxu0 %v1456
        %v1838 = vpop.f32.mrb[0].mxu0
        %v1839 = vadd.f32 0.0, %v1838
        %v1840 = vpop.f32.mrb[0].mxu0
        %1841 = vmatprep.mubr.f32.mxu0 0.0
        %1842 = vmatmul.mubr.f32.gmra.mrb[0].mxu0 %v1457
        %v1843 = vpop.f32.mrb[0].mxu0
        %v1844 = vadd.f32 0.0, %v1843
        %v1845 = vpop.f32.mrb[0].mxu0
        %1846 = vmatprep.mubr.f32.mxu0 0.0
        %1847 = vmatmul.mubr.f32.gmra.mrb[0].mxu0 %v1458
        %v1848 = vpop.f32.mrb[0].mxu0
        %v1849 = vadd.f32 0.0, %v1848
        %v1850 = vpop.f32.mrb[0].mxu0
        %1851 = vmatprep.mubr.f32.mxu0 0.0
        %1852 = vmatmul.mubr.f32.gmra.mrb[0].mxu0 %v1459
        %v1853 = vpop.f32.mrb[0].mxu0
        %v1854 = vadd.f32 0.0, %v1853
        %v1855 = vpop.f32.mrb[0].mxu0
        %1856 = vmatprep.mubr.f32.mxu0 0.0
        %1857 = vmatmul.mubr.f32.gmra.mrb[0].mxu0 %v1460
        %v1858 = vpop.f32.mrb[0].mxu0
        %v1859 = vadd.f32 0.0, %v1858
        %v1860 = vpop.f32.mrb[0].mxu0
        %1861 = vdwg.mxu0
        %1862 = vxpose.xlu0.b32.start [1/16] %v1544, 128
        %1863 = vxpose.xlu0.b32.cont [2/16] %v1549, 128
        %1864 = vxpose.xlu0.b32.cont [3/16] %v1554, 128
        %1865 = vxpose.xlu0.b32.cont [4/16] %v1559, 128
        %1866 = vxpose.xlu0.b32.cont [5/16] %v1564, 128
        %1867 = vxpose.xlu0.b32.cont [6/16] %v1569, 128
        %1868 = vxpose.xlu0.b32.cont [7/16] %v1574, 128
        %1869 = vxpose.xlu0.b32.cont [8/16] %v1579, 128
        %1870 = vxpose.xlu0.b32.cont [9/16] %v1584, 128
        %1871 = vxpose.xlu0.b32.cont [10/16] %v1589, 128
        %1872 = vxpose.xlu0.b32.cont [11/16] %v1594, 128
        %1873 = vxpose.xlu0.b32.cont [12/16] %v1599, 128
        %1874 = vxpose.xlu0.b32.cont [13/16] %v1604, 128
        %1875 = vxpose.xlu0.b32.cont [14/16] %v1609, 128
        %1876 = vxpose.xlu0.b32.cont [15/16] %v1614, 128
        %1877 = vxpose.xlu0.b32.end [16/16] %v1619, 128
        %v1878 = vpop.trf.xlu0
        %v1879 = vpop.trf.xlu0
        %v1880 = vpop.trf.xlu0
        %v1881 = vpop.trf.xlu0
        %v1882 = vpop.trf.xlu0
        %v1883 = vpop.trf.xlu0
        %v1884 = vpop.trf.xlu0
        %v1885 = vpop.trf.xlu0
        %v1886 = vpop.trf.xlu0
        %v1887 = vpop.trf.xlu0
        %v1888 = vpop.trf.xlu0
        %v1889 = vpop.trf.xlu0
        %v1890 = vpop.trf.xlu0
        %v1891 = vpop.trf.xlu0
        %v1892 = vpop.trf.xlu0
        %v1893 = vpop.trf.xlu0
        %1894 = vxpose.xlu0.b32.start [1/16] %v1624, 128
        %1895 = vxpose.xlu0.b32.cont [2/16] %v1629, 128
        %1896 = vxpose.xlu0.b32.cont [3/16] %v1634, 128
        %1897 = vxpose.xlu0.b32.cont [4/16] %v1639, 128
        %1898 = vxpose.xlu0.b32.cont [5/16] %v1644, 128
        %1899 = vxpose.xlu0.b32.cont [6/16] %v1649, 128
        %1900 = vxpose.xlu0.b32.cont [7/16] %v1654, 128
        %1901 = vxpose.xlu0.b32.cont [8/16] %v1659, 128
        %1902 = vxpose.xlu0.b32.cont [9/16] %v1664, 128
        %1903 = vxpose.xlu0.b32.cont [10/16] %v1669, 128
        %1904 = vxpose.xlu0.b32.cont [11/16] %v1674, 128
        %1905 = vxpose.xlu0.b32.cont [12/16] %v1679, 128
        %1906 = vxpose.xlu0.b32.cont [13/16] %v1684, 128
        %1907 = vxpose.xlu0.b32.cont [14/16] %v1689, 128
        %1908 = vxpose.xlu0.b32.cont [15/16] %v1694, 128
        %1909 = vxpose.xlu0.b32.end [16/16] %v1699, 128
        %v1910 = vpop.trf.xlu0
        %v1911 = vpop.trf.xlu0
        %v1912 = vpop.trf.xlu0
        %v1913 = vpop.trf.xlu0
        %v1914 = vpop.trf.xlu0
        %v1915 = vpop.trf.xlu0
        %v1916 = vpop.trf.xlu0
        %v1917 = vpop.trf.xlu0
        %v1918 = vpop.trf.xlu0
        %v1919 = vpop.trf.xlu0
        %v1920 = vpop.trf.xlu0
        %v1921 = vpop.trf.xlu0
        %v1922 = vpop.trf.xlu0
        %v1923 = vpop.trf.xlu0
        %v1924 = vpop.trf.xlu0
        %v1925 = vpop.trf.xlu0
        %1926 = vxpose.xlu0.b32.start [1/16] %v1704, 128
        %1927 = vxpose.xlu0.b32.cont [2/16] %v1709, 128
        %1928 = vxpose.xlu0.b32.cont [3/16] %v1714, 128
        %1929 = vxpose.xlu0.b32.cont [4/16] %v1719, 128
        %1930 = vxpose.xlu0.b32.cont [5/16] %v1724, 128
        %1931 = vxpose.xlu0.b32.cont [6/16] %v1729, 128
        %1932 = vxpose.xlu0.b32.cont [7/16] %v1734, 128
        %1933 = vxpose.xlu0.b32.cont [8/16] %v1739, 128
        %1934 = vxpose.xlu0.b32.cont [9/16] %v1744, 128
        %1935 = vxpose.xlu0.b32.cont [10/16] %v1749, 128
        %1936 = vxpose.xlu0.b32.cont [11/16] %v1754, 128
        %1937 = vxpose.xlu0.b32.cont [12/16] %v1759, 128
        %1938 = vxpose.xlu0.b32.cont [13/16] %v1764, 128
        %1939 = vxpose.xlu0.b32.cont [14/16] %v1769, 128
        %1940 = vxpose.xlu0.b32.cont [15/16] %v1774, 128
        %1941 = vxpose.xlu0.b32.end [16/16] %v1779, 128
        %v1942 = vpop.trf.xlu0
        %v1943 = vpop.trf.xlu0
        %v1944 = vpop.trf.xlu0
        %v1945 = vpop.trf.xlu0
        %v1946 = vpop.trf.xlu0
        %v1947 = vpop.trf.xlu0
        %v1948 = vpop.trf.xlu0
        %v1949 = vpop.trf.xlu0
        %v1950 = vpop.trf.xlu0
        %v1951 = vpop.trf.xlu0
        %v1952 = vpop.trf.xlu0
        %v1953 = vpop.trf.xlu0
        %v1954 = vpop.trf.xlu0
        %v1955 = vpop.trf.xlu0
        %v1956 = vpop.trf.xlu0
        %v1957 = vpop.trf.xlu0
        %1958 = vxpose.xlu0.b32.start [1/16] %v1784, 128
        %1959 = vxpose.xlu0.b32.cont [2/16] %v1789, 128
        %1960 = vxpose.xlu0.b32.cont [3/16] %v1794, 128
        %1961 = vxpose.xlu0.b32.cont [4/16] %v1799, 128
        %1962 = vxpose.xlu0.b32.cont [5/16] %v1804, 128
        %1963 = vxpose.xlu0.b32.cont [6/16] %v1809, 128
        %1964 = vxpose.xlu0.b32.cont [7/16] %v1814, 128
        %1965 = vxpose.xlu0.b32.cont [8/16] %v1819, 128
        %1966 = vxpose.xlu0.b32.cont [9/16] %v1824, 128
        %1967 = vxpose.xlu0.b32.cont [10/16] %v1829, 128
        %1968 = vxpose.xlu0.b32.cont [11/16] %v1834, 128
        %1969 = vxpose.xlu0.b32.cont [12/16] %v1839, 128
        %1970 = vxpose.xlu0.b32.cont [13/16] %v1844, 128
        %1971 = vxpose.xlu0.b32.cont [14/16] %v1849, 128
        %1972 = vxpose.xlu0.b32.cont [15/16] %v1854, 128
        %1973 = vxpose.xlu0.b32.end [16/16] %v1859, 128
        %v1974 = vpop.trf.xlu0
        %v1975 = vpop.trf.xlu0
        %v1976 = vpop.trf.xlu0
        %v1977 = vpop.trf.xlu0
        %v1978 = vpop.trf.xlu0
        %v1979 = vpop.trf.xlu0
        %v1980 = vpop.trf.xlu0
        %v1981 = vpop.trf.xlu0
        %v1982 = vpop.trf.xlu0
        %v1983 = vpop.trf.xlu0
        %v1984 = vpop.trf.xlu0
        %v1985 = vpop.trf.xlu0
        %v1986 = vpop.trf.xlu0
        %v1987 = vpop.trf.xlu0
        %v1988 = vpop.trf.xlu0
        %v1989 = vpop.trf.xlu0
        %v1990 = vld [vmem:[%s6] sm:$0xff]
        %1992 = vset.pattern.permute.xlu0 0
        %1993 = vperm.xlu0 %1992, %v1990
        %v1994 = vpop.permute.xlu0 %1993
        %v1996 = vadd.f32 %v1878, %v1994
        %v1997 = vadd.f32 %v1910, %v1994
        %v1998 = vadd.f32 %v1942, %v1994
        %v1999 = vadd.f32 %v1974, %v1994
        %v2000 = vtanh.pop %v1996
        %v2001 = vtanh.pop %v1997
        %v2002 = vtanh.pop %v1998
        %v2003 = vtanh.pop %v1999
        %2005 = vrot.lane.b32.xlu0 %v1549, 8
        %v2006 = vpop.permute.xlu0 %2005
        %2009 = vrot.lane.b32.xlu0 %v1554, 16
        %v2010 = vpop.permute.xlu0 %2009
        %2013 = vrot.lane.b32.xlu0 %v1559, 24
        %v2014 = vpop.permute.xlu0 %2013
        %2017 = vrot.lane.b32.xlu0 %v1564, 32
        %v2018 = vpop.permute.xlu0 %2017
        %2021 = vrot.lane.b32.xlu0 %v1569, 40
        %v2022 = vpop.permute.xlu0 %2021
        %2025 = vrot.lane.b32.xlu0 %v1574, 48
        %v2026 = vpop.permute.xlu0 %2025
        %2029 = vrot.lane.b32.xlu0 %v1579, 56
        %v2030 = vpop.permute.xlu0 %2029
        %2033 = vrot.lane.b32.xlu0 %v1584, 64
        %v2034 = vpop.permute.xlu0 %2033
        %2037 = vrot.lane.b32.xlu0 %v1589, 72
        %v2038 = vpop.permute.xlu0 %2037
        %2041 = vrot.lane.b32.xlu0 %v1594, 80
        %v2042 = vpop.permute.xlu0 %2041
        %2045 = vrot.lane.b32.xlu0 %v1599, 88
        %v2046 = vpop.permute.xlu0 %2045
        %2049 = vrot.lane.b32.xlu0 %v1604, 96
        %v2050 = vpop.permute.xlu0 %2049
        %2053 = vrot.lane.b32.xlu0 %v1609, 104
        %v2054 = vpop.permute.xlu0 %2053
        %2057 = vrot.lane.b32.xlu0 %v1614, 112
        %v2058 = vpop.permute.xlu0 %2057
        %2061 = vrot.lane.b32.xlu0 %v1619, 120
        %v2062 = vpop.permute.xlu0 %2061
        %vm2064 = vcmask 64512
        %v2065 = vsel %vm2064, %v1544, %v2006
        %vm2066 = vcmask 130048
        %v2067 = vsel %vm2066, %v2065, %v2010
        %vm2068 = vcmask 195584
        %v2069 = vsel %vm2068, %v2067, %v2014
        %v2070 = vsel %vm555, %v2069, %v2018
        %vm2071 = vcmask 326656
        %v2072 = vsel %vm2071, %v2070, %v2022
        %vm2073 = vcmask 392192
        %v2074 = vsel %vm2073, %v2072, %v2026
        %vm2075 = vcmask 457728
        %v2076 = vsel %vm2075, %v2074, %v2030
        %vm2077 = vcmask 523264
        %v2078 = vsel %vm2077, %v2076, %v2034
        %vm2079 = vcmask 588800
        %v2080 = vsel %vm2079, %v2078, %v2038
        %vm2081 = vcmask 654336
        %v2082 = vsel %vm2081, %v2080, %v2042
        %vm2083 = vcmask 719872
        %v2084 = vsel %vm2083, %v2082, %v2046
        %vm2085 = vcmask 785408
        %v2086 = vsel %vm2085, %v2084, %v2050
        %vm2087 = vcmask 850944
        %v2088 = vsel %vm2087, %v2086, %v2054
        %vm2089 = vcmask 916480
        %v2090 = vsel %vm2089, %v2088, %v2058
        %vm2091 = vcmask 982016
        %v2092 = vsel %vm2091, %v2090, %v2062
        %2094 = vrot.lane.b32.xlu0 %v1629, 8
        %v2095 = vpop.permute.xlu0 %2094
        %2098 = vrot.lane.b32.xlu0 %v1634, 16
        %v2099 = vpop.permute.xlu0 %2098
        %2102 = vrot.lane.b32.xlu0 %v1639, 24
        %v2103 = vpop.permute.xlu0 %2102
        %2106 = vrot.lane.b32.xlu0 %v1644, 32
        %v2107 = vpop.permute.xlu0 %2106
        %2110 = vrot.lane.b32.xlu0 %v1649, 40
        %v2111 = vpop.permute.xlu0 %2110
        %2114 = vrot.lane.b32.xlu0 %v1654, 48
        %v2115 = vpop.permute.xlu0 %2114
        %2118 = vrot.lane.b32.xlu0 %v1659, 56
        %v2119 = vpop.permute.xlu0 %2118
        %2122 = vrot.lane.b32.xlu0 %v1664, 64
        %v2123 = vpop.permute.xlu0 %2122
        %2126 = vrot.lane.b32.xlu0 %v1669, 72
        %v2127 = vpop.permute.xlu0 %2126
        %2130 = vrot.lane.b32.xlu0 %v1674, 80
        %v2131 = vpop.permute.xlu0 %2130
        %2134 = vrot.lane.b32.xlu0 %v1679, 88
        %v2135 = vpop.permute.xlu0 %2134
        %2138 = vrot.lane.b32.xlu0 %v1684, 96
        %v2139 = vpop.permute.xlu0 %2138
        %2142 = vrot.lane.b32.xlu0 %v1689, 104
        %v2143 = vpop.permute.xlu0 %2142
        %2146 = vrot.lane.b32.xlu0 %v1694, 112
        %v2147 = vpop.permute.xlu0 %2146
        %2150 = vrot.lane.b32.xlu0 %v1699, 120
        %v2151 = vpop.permute.xlu0 %2150
        %v2153 = vsel %vm2064, %v1624, %v2095
        %v2154 = vsel %vm2066, %v2153, %v2099
        %v2155 = vsel %vm2068, %v2154, %v2103
        %v2156 = vsel %vm555, %v2155, %v2107
        %v2157 = vsel %vm2071, %v2156, %v2111
        %v2158 = vsel %vm2073, %v2157, %v2115
        %v2159 = vsel %vm2075, %v2158, %v2119
        %v2160 = vsel %vm2077, %v2159, %v2123
        %v2161 = vsel %vm2079, %v2160, %v2127
        %v2162 = vsel %vm2081, %v2161, %v2131
        %v2163 = vsel %vm2083, %v2162, %v2135
        %v2164 = vsel %vm2085, %v2163, %v2139
        %v2165 = vsel %vm2087, %v2164, %v2143
        %v2166 = vsel %vm2089, %v2165, %v2147
        %v2167 = vsel %vm2091, %v2166, %v2151
        %2169 = vrot.lane.b32.xlu0 %v1709, 8
        %v2170 = vpop.permute.xlu0 %2169
        %2173 = vrot.lane.b32.xlu0 %v1714, 16
        %v2174 = vpop.permute.xlu0 %2173
        %2177 = vrot.lane.b32.xlu0 %v1719, 24
        %v2178 = vpop.permute.xlu0 %2177
        %2181 = vrot.lane.b32.xlu0 %v1724, 32
        %v2182 = vpop.permute.xlu0 %2181
        %2185 = vrot.lane.b32.xlu0 %v1729, 40
        %v2186 = vpop.permute.xlu0 %2185
        %2189 = vrot.lane.b32.xlu0 %v1734, 48
        %v2190 = vpop.permute.xlu0 %2189
        %2193 = vrot.lane.b32.xlu0 %v1739, 56
        %v2194 = vpop.permute.xlu0 %2193
        %2197 = vrot.lane.b32.xlu0 %v1744, 64
        %v2198 = vpop.permute.xlu0 %2197
        %2201 = vrot.lane.b32.xlu0 %v1749, 72
        %v2202 = vpop.permute.xlu0 %2201
        %2205 = vrot.lane.b32.xlu0 %v1754, 80
        %v2206 = vpop.permute.xlu0 %2205
        %2209 = vrot.lane.b32.xlu0 %v1759, 88
        %v2210 = vpop.permute.xlu0 %2209
        %2213 = vrot.lane.b32.xlu0 %v1764, 96
        %v2214 = vpop.permute.xlu0 %2213
        %2217 = vrot.lane.b32.xlu0 %v1769, 104
        %v2218 = vpop.permute.xlu0 %2217
        %2221 = vrot.lane.b32.xlu0 %v1774, 112
        %v2222 = vpop.permute.xlu0 %2221
        %2225 = vrot.lane.b32.xlu0 %v1779, 120
        %v2226 = vpop.permute.xlu0 %2225
        %v2228 = vsel %vm2064, %v1704, %v2170
        %v2229 = vsel %vm2066, %v2228, %v2174
        %v2230 = vsel %vm2068, %v2229, %v2178
        %v2231 = vsel %vm555, %v2230, %v2182
        %v2232 = vsel %vm2071, %v2231, %v2186
        %v2233 = vsel %vm2073, %v2232, %v2190
        %v2234 = vsel %vm2075, %v2233, %v2194
        %v2235 = vsel %vm2077, %v2234, %v2198
        %v2236 = vsel %vm2079, %v2235, %v2202
        %v2237 = vsel %vm2081, %v2236, %v2206
        %v2238 = vsel %vm2083, %v2237, %v2210
        %v2239 = vsel %vm2085, %v2238, %v2214
        %v2240 = vsel %vm2087, %v2239, %v2218
        %v2241 = vsel %vm2089, %v2240, %v2222
        %v2242 = vsel %vm2091, %v2241, %v2226
        %2244 = vrot.lane.b32.xlu0 %v1789, 8
        %v2245 = vpop.permute.xlu0 %2244
        %2248 = vrot.lane.b32.xlu0 %v1794, 16
        %v2249 = vpop.permute.xlu0 %2248
        %2252 = vrot.lane.b32.xlu0 %v1799, 24
        %v2253 = vpop.permute.xlu0 %2252
        %2256 = vrot.lane.b32.xlu0 %v1804, 32
        %v2257 = vpop.permute.xlu0 %2256
        %2260 = vrot.lane.b32.xlu0 %v1809, 40
        %v2261 = vpop.permute.xlu0 %2260
        %2264 = vrot.lane.b32.xlu0 %v1814, 48
        %v2265 = vpop.permute.xlu0 %2264
        %2268 = vrot.lane.b32.xlu0 %v1819, 56
        %v2269 = vpop.permute.xlu0 %2268
        %2272 = vrot.lane.b32.xlu0 %v1824, 64
        %v2273 = vpop.permute.xlu0 %2272
        %2276 = vrot.lane.b32.xlu0 %v1829, 72
        %v2277 = vpop.permute.xlu0 %2276
        %2280 = vrot.lane.b32.xlu0 %v1834, 80
        %v2281 = vpop.permute.xlu0 %2280
        %2284 = vrot.lane.b32.xlu0 %v1839, 88
        %v2285 = vpop.permute.xlu0 %2284
        %2288 = vrot.lane.b32.xlu0 %v1844, 96
        %v2289 = vpop.permute.xlu0 %2288
        %2292 = vrot.lane.b32.xlu0 %v1849, 104
        %v2293 = vpop.permute.xlu0 %2292
        %2296 = vrot.lane.b32.xlu0 %v1854, 112
        %v2297 = vpop.permute.xlu0 %2296
        %2300 = vrot.lane.b32.xlu0 %v1859, 120
        %v2301 = vpop.permute.xlu0 %2300
        %v2303 = vsel %vm2064, %v1784, %v2245
        %v2304 = vsel %vm2066, %v2303, %v2249
        %v2305 = vsel %vm2068, %v2304, %v2253
        %v2306 = vsel %vm555, %v2305, %v2257
        %v2307 = vsel %vm2071, %v2306, %v2261
        %v2308 = vsel %vm2073, %v2307, %v2265
        %v2309 = vsel %vm2075, %v2308, %v2269
        %v2310 = vsel %vm2077, %v2309, %v2273
        %v2311 = vsel %vm2079, %v2310, %v2277
        %v2312 = vsel %vm2081, %v2311, %v2281
        %v2313 = vsel %vm2083, %v2312, %v2285
        %v2314 = vsel %vm2085, %v2313, %v2289
        %v2315 = vsel %vm2087, %v2314, %v2293
        %v2316 = vsel %vm2089, %v2315, %v2297
        %v2317 = vsel %vm2091, %v2316, %v2301
        %v2318 = vld [vmem:[%s7] sm:$0xf]
        %v2320 = vlaneseq
        %v2321 = vshrl.u32 %v2320, 7
        %v2322 = vsub.s32 0, %v2321
        %v2323 = vrot.slane %v2318, %v2322
        %v2324 = vlaneseq
        %v2325 = vshrl.u32 %v2324, 7
        %v2326 = vsub.s32 1, %v2325
        %v2327 = vrot.slane %v2318, %v2326
        %v2328 = vlaneseq
        %v2329 = vshrl.u32 %v2328, 7
        %v2330 = vsub.s32 2, %v2329
        %v2331 = vrot.slane %v2318, %v2330
        %v2332 = vlaneseq
        %v2333 = vshrl.u32 %v2332, 7
        %v2334 = vsub.s32 3, %v2333
        %v2335 = vrot.slane %v2318, %v2334
        %v2340 = vadd.f32 %v2092, %v2323
        %v2341 = vadd.f32 %v2167, %v2327
        %v2342 = vadd.f32 %v2242, %v2331
        %v2343 = vadd.f32 %v2317, %v2335
        %v2344 = vtanh.pop %v2340
        %v2345 = vtanh.pop %v2341
        %v2346 = vtanh.pop %v2342
        %v2347 = vtanh.pop %v2343
        %v2348 = vmul.f32 %v2000, %v2344
        %v2349 = vmul.f32 %v2001, %v2345
        %v2350 = vmul.f32 %v2002, %v2346
        %v2351 = vmul.f32 %v2003, %v2347
        %2352 = vst [vmem:[%s299] sm:$0xff] %v2348
        %2353 = vst [vmem:[%s299 + $0x8] sm:$0xff] %v2349
        %2354 = vst [vmem:[%s299 + $0x10] sm:$0xff] %v2350
        %2355 = vst [vmem:[%s299 + $0x18] sm:$0xff] %v2351
        %s2356 = sand.u32 %s203, 1
        %s2357 = scalar_lea.sflag [#allocation3], %s2356
        %s2358 = sand.u32 %s203, 1
        %s2359 = smul.addr %s2358, 32
        %s2360 = scalar_lea.vmem [#allocation2], %s2359
        // Predicated region
        $region53: #{tpu_custom_call.1} parent=51 // pred_check
          %p2361 = pneg %p213
        $region54: #{tpu_custom_call.1} parent=51 // pred_check_branch
          %2363 = sbr.rel (%p2361) target = $region56
        $region55: #{tpu_custom_call.1} parent=51 // pred_region
          %s2364 = smul.u32 4, %s22
          %s2366 = ssub.s32 512, 512
          %2367 = vsyncadd %s2357, %s2366
          %s2368 = smul.addr %s2364, 128
          %s2369 = scalar_lea.hbm %s8, %s2368
          %s2371 = sshll.u32 %s2360, 4
          %s2372 = int_to_ptr.vmem [resolvable:$true] %s2371
          %2374 = dma.vmem_to_hbm [thread:$0]  %s2372, 512, %s2369, %s2357
        $region56: #{tpu_custom_call.1} parent=51 // pred_fallthru
          _
      $region52: #{tpu_custom_call.1} parent=5 // pred_fallthru
        _
      %p2375 = scmp.le.s32.totalorder 2, %s17
      // Predicated region
      $region57: #{tpu_custom_call.1} parent=5 // pred_check
        %p2376 = pneg %p2375
      $region58: #{tpu_custom_call.1} parent=5 // pred_check_branch
        %2378 = sbr.rel (%p2376) target = $region60
      $region59: #{tpu_custom_call.1} parent=5 // pred_region
        %s2379 = ssub.s32 %s17, 2
        // Predicated region
        $region61: #{tpu_custom_call.1} parent=59 // pred_check
          %p2380 = pneg %p219
        $region62: #{tpu_custom_call.1} parent=59 // pred_check_branch
          %2382 = sbr.rel (%p2380) target = $region64
        $region63: #{tpu_custom_call.1} parent=59 // pred_region
          %s2383 = sand.u32 %s204, 1
          %s2384 = scalar_lea.sflag [#allocation3], %s2383
          %s2385 = sand.u32 %s204, 1
          %s2386 = smul.addr %s2385, 32
          %s2387 = scalar_lea.vmem [#allocation2], %s2386
          %2388 = dma.done %s2384, 512
        $region64: #{tpu_custom_call.1} parent=59 // pred_fallthru
          _
      $region60: #{tpu_custom_call.1} parent=5 // pred_fallthru
        _
    $region6: #{tpu_custom_call.1} parent=1 // loop_footer
      %s21 = sadd.s32 1, %s17
    $region7: #{tpu_custom_call.1} parent=1 // loop_footer_branch
      %16 = sbr.rel target = $region3
    $region8: #{tpu_custom_call.1} parent=1 // loop_exit
      _
    %2389 = vsyncpa [#allocation3], 1
    %s2390 = scalar_lea.sflag [#allocation3], 1
    %2391 = vsyncpa %s2390, 1

</llo_original>
